<compile_context>
chip_gen: v6e
topology: v6e:2x2x1
jax: 0.10.0
libtpu: 0.0.40
codegen_flags: <defaults>
</compile_context>

<pallas_src>
import functools
import math

import jax
import jax.numpy as jnp
from jax.experimental import pallas as pl
from jax.experimental.pallas import tpu as pltpu


NEG_INF = -1e9
LOG_EPS_FLOOR = math.log(1e-10)   # mirrors torch.log(prob + 1e-10) floor
NLPAD = 128                       # classifier lanes padded to full lane width


# ----------------------------- Pallas kernel -------------------------------

def fused_block_kernel(
        x_ref, bias_ref, labels_ref,
        wqkv_ref, bqkv_ref, wo_ref, bo_ref,
        g1_ref, be1_ref, w1_ref, b1_ref, w2_ref, b2_ref, g2_ref, be2_ref,
        wc_ref, bc_ref,
        prob_ref, loss_ref,
        *, loss_weight):
    """One sequence per program: encoder block + [CLS] head + weighted BCE term."""
    S, H = x_ref.shape
    x_bf = x_ref[...]                              # (S, H) bf16 (halved ingress)
    x = x_bf.astype(jnp.float32)                   # f32 for residual / LN math

    # --- fused QKV projection (1/sqrt(H) folded into the Q slice at init) ---
    qkv = jnp.dot(x_bf, wqkv_ref[...],
                  preferred_element_type=jnp.float32) + bqkv_ref[...]   # (S, 3H)
    # TODO(synk): at realistic sizes keep H a multiple of 128 so these lane
    # slices at offsets 0/H/2H stay (8,128)-tile aligned (no VMEM copies).
    q = qkv[:, 0 * H:1 * H]
    k = qkv[:, 1 * H:2 * H]
    v = qkv[:, 2 * H:3 * H]

    # --- attention (scores are only [S, S] per program) ---
    scores = jax.lax.dot_general(                  # contract last dims: q @ k^T
        q.astype(jnp.bfloat16), k.astype(jnp.bfloat16),
        dimension_numbers=(((1,), (1,)), ((), ())),
        preferred_element_type=jnp.float32)        # (S, S)
    scores = scores + bias_ref[...]                # additive bias, precomputed
    m = jnp.max(scores, axis=-1, keepdims=True)
    p = jnp.exp(scores - m)
    l = jnp.sum(p, axis=-1, keepdims=True)
    # normalize AFTER the PV matmul: S*H multiplies instead of S*S
    attn = jnp.dot(p.astype(jnp.bfloat16), v.astype(jnp.bfloat16),
                   preferred_element_type=jnp.float32)                  # (S, H)
    attn = attn * pl.reciprocal(l, approx=True)
    # TODO(synk): for S >~ 1K switch to a flash-style K-block online softmax.
    attn = jnp.dot(attn.astype(jnp.bfloat16), wo_ref[...],
                   preferred_element_type=jnp.float32) + bo_ref[...]

    # --- residual + LayerNorm 1 (f32) ---
    h = x + attn
    mu = jnp.mean(h, axis=-1, keepdims=True)
    var = jnp.mean((h - mu) ** 2, axis=-1, keepdims=True)
    h = (h - mu) * jax.lax.rsqrt(var + 1e-5) * g1_ref[...] + be1_ref[...]

    # --- feed forward ---
    f = jnp.dot(h.astype(jnp.bfloat16), w1_ref[...],
                preferred_element_type=jnp.float32) + b1_ref[...]
    f = jax.nn.gelu(f, approximate=True)
    f = jnp.dot(f.astype(jnp.bfloat16), w2_ref[...],
                preferred_element_type=jnp.float32) + b2_ref[...]

    # --- residual + LayerNorm 2 (f32) ---
    h2 = h + f
    mu2 = jnp.mean(h2, axis=-1, keepdims=True)
    var2 = jnp.mean((h2 - mu2) ** 2, axis=-1, keepdims=True)
    out2 = (h2 - mu2) * jax.lax.rsqrt(var2 + 1e-5) * g2_ref[...] + be2_ref[...]

    # NOTE: padded (input_ids==1) *query* rows are not masked; only the CLS row
    # below is consumed, which matches the reference semantics.

    # --- [CLS] pooling (aligned row slice) + classifier head (padded lanes) ---
    x0 = out2[0:1, :]                                                  # (1, H)
    logits = jnp.dot(x0.astype(jnp.bfloat16), wc_ref[...],
                     preferred_element_type=jnp.float32) + bc_ref[...]  # (1, 128)
    prob = jax.nn.sigmoid(logits)
    prob_ref[...] = prob.astype(prob_ref.dtype)                        # lane-dense

    # --- weighted BCE term for this sequence (mean over batch in wrapper) ---
    # stable equivalent of log(sigmoid(z)+1e-10): log-sigmoid with a 1e-10 floor
    lab = labels_ref[pl.program_id(0)]                                 # scalar f32
    z0 = logits[:, 0:1]                                                # (1, 1)
    log_p = jnp.minimum(z0, 0.0) - jnp.log(1.0 + jnp.exp(-jnp.abs(z0)))
    log_1mp = jnp.minimum(-z0, 0.0) - jnp.log(1.0 + jnp.exp(-jnp.abs(z0)))
    log_p = jnp.maximum(log_p, LOG_EPS_FLOOR)
    log_1mp = jnp.maximum(log_1mp, LOG_EPS_FLOOR)
    term = loss_weight * log_p * lab + log_1mp * (1.0 - lab)           # (1, 1)
    loss_ref[...] = jnp.broadcast_to(term, loss_ref.shape)             # lane-dense


# ----------------------------- wrapper --------------------------------------

def _nbytes(a):
    return int(a.size) * a.dtype.itemsize


def my_auto_model_forward(params, input_ids, labels=None, loss_weight=1.5):
    """Mirrors MyAutoModel.forward(input_ids, labels)."""
    B, S = input_ids.shape
    H = params['tok_emb'].shape[1]
    F = params['w1'].shape[1]
    NL = params['num_labels']

    # embedding lookup (glue, plain JAX gather) -> bf16 activation ingress
    x = (params['tok_emb'][input_ids]
         + params['pos_emb'][None, :S, :]).astype(jnp.bfloat16)        # [B,S,H]
    # additive attention bias, precomputed once per call (input_ids.ne(1) mask)
    bias = ((input_ids == 1).astype(jnp.float32) * NEG_INF)[:, None, :]  # [B,1,S]

    labels1d = (jnp.zeros((B,), jnp.float32) if labels is None
                else labels.astype(jnp.float32).reshape(B))

    weight_args = (params['wqkv'], params['bqkv'], params['wo'], params['bo'],
                   params['g1'], params['be1'], params['w1'], params['b1'],
                   params['w2'], params['b2'], params['g2'], params['be2'],
                   params['wc_pad'], params['bc_pad'])
    args = (x, bias, labels1d) + weight_args

    # --- specs: streamed per-sequence activation tiles, resident weights ---
    in_specs = (
        [pl.BlockSpec((pl.Squeezed(), S, H), lambda b: (b, 0, 0)),     # x tile
         pl.BlockSpec((pl.Squeezed(), 1, S), lambda b: (b, 0, 0)),     # attn bias
         pl.BlockSpec(memory_space=pltpu.MemorySpace.SMEM)]            # labels
        + [pl.BlockSpec(w.shape, lambda b, n=w.ndim: (0,) * n)         # resident
           for w in weight_args]
    )
    out_specs = (
        pl.BlockSpec((pl.Squeezed(), 1, NLPAD), lambda b: (b, 0, 0)),  # prob row
        pl.BlockSpec((pl.Squeezed(), 1, NLPAD), lambda b: (b, 0, 0)),  # loss row
    )

    # --- cost estimate (whole call) ---
    flops = int(2 * B * S * H * 3 * H          # fused QKV
                + 4 * B * S * S * H            # scores + attn*V
                + 2 * B * S * H * H            # output proj
                + 4 * B * S * H * F            # FFN
                + 2 * B * H * NLPAD)           # head
    transcendentals = int(B * S * S + B * S * F + B * NLPAD)
    bytes_accessed = int(sum(_nbytes(a) for a in args) + 2 * B * NLPAD * 4)

    # --- explicit VMEM budget from actual tile sizes (64 MiB cap for v7x) ---
    weight_bytes = sum(_nbytes(a) for a in weight_args)
    block_bytes = S * H * 2 + S * 4 + 2 * NLPAD * 4          # streamed per step
    interm_bytes = 4 * (3 * S * H + 2 * S * S + 4 * S * H + 2 * S * F + 2 * NLPAD)
    vmem_limit = int(min(64 << 20,
                         max(4 << 20,
                             2 * weight_bytes + 2 * block_bytes
                             + 2 * interm_bytes + (1 << 20))))

    kernel = functools.partial(fused_block_kernel,
                               loss_weight=float(loss_weight))

    prob_pad, loss_pad = pl.pallas_call(
        kernel,
        grid=(B,),
        out_shape=(jax.ShapeDtypeStruct((B, 1, NLPAD), jnp.float32),
                   jax.ShapeDtypeStruct((B, 1, NLPAD), jnp.float32)),
        in_specs=in_specs,
        out_specs=out_specs,
        compiler_params=pltpu.CompilerParams(
            dimension_semantics=("parallel",),        # megacore on v7x
            vmem_limit_bytes=vmem_limit),
        cost_estimate=pl.CostEstimate(flops=flops,
                                      transcendentals=transcendentals,
                                      bytes_accessed=bytes_accessed),
    )(*args)

    prob = prob_pad[:, 0, :NL]
    # self.dropout(outputs): identity in eval mode
    # TODO(synk): train-mode dropout would use pltpu.prng_seed/prng_random_bits.
    if labels is None:
        return prob
    # grid axis is fully parallel, so the tiny mean over B is done in the wrapper
    loss = -jnp.mean(loss_pad[:, 0, 0])
    return loss, prob


# ----------------------------- params & main --------------------------------

def init_params(key, vocab, max_seq, H, F, NL):
    ks = jax.random.split(key, 10)
    s = 0.02
    n = jax.random.normal
    inv_sqrt_h = 1.0 / math.sqrt(H)

    wq = s * n(ks[2], (H, H), jnp.float32) * inv_sqrt_h   # fold softmax scale
    wk = s * n(ks[3], (H, H), jnp.float32)
    wv = s * n(ks[4], (H, H), jnp.float32)
    bq = jnp.zeros((H,), jnp.float32) * inv_sqrt_h
    bk = jnp.zeros((H,), jnp.float32)
    bv = jnp.zeros((H,), jnp.float32)

    wc = s * n(ks[8], (H, NL), jnp.float32)
    wc_pad = jnp.zeros((H, NLPAD), jnp.float32).at[:, :NL].set(wc)

    return {
        'num_labels': NL,
        'tok_emb': s * n(ks[0], (vocab, H), jnp.float32),
        'pos_emb': s * n(ks[1], (max_seq, H), jnp.float32),
        # fused QKV weights in bf16 for the MXU; biases / LN params in f32
        'wqkv': jnp.concatenate([wq, wk, wv], axis=1).astype(jnp.bfloat16),
        'bqkv': jnp.concatenate([bq, bk, bv])[None, :],
        'wo': (s * n(ks[5], (H, H), jnp.float32)).astype(jnp.bfloat16),
        'bo': jnp.zeros((1, H), jnp.float32),
        'g1': jnp.ones((1, H), jnp.float32), 'be1': jnp.zeros((1, H), jnp.float32),
        'w1': (s * n(ks[6], (H, F), jnp.float32)).astype(jnp.bfloat16),
        'b1': jnp.zeros((1, F), jnp.float32),
        'w2': (s * n(ks[7], (F, H), jnp.float32)).astype(jnp.bfloat16),
        'b2': jnp.zeros((1, H), jnp.float32),
        'g2': jnp.ones((1, H), jnp.float32), 'be2': jnp.zeros((1, H), jnp.float32),
        'wc_pad': wc_pad.astype(jnp.bfloat16),
        'bc_pad': jnp.zeros((1, NLPAD), jnp.float32),
    }


if __name__ == "__main__":
    B, S, H, F, VOCAB, NL = 2, 8, 32, 64, 50, 2
    LOSS_WEIGHT = 1.5   # args.loss_weight
    # args.dropout_probability = 0.1 (identity in eval mode)

    key = jax.random.PRNGKey(0)
    k_par, k_ids, k_lab = jax.random.split(key, 3)

    params = init_params(k_par, VOCAB, S, H, F, NL)
    input_ids = jax.random.randint(k_ids, (B, S), 0, VOCAB, dtype=jnp.int32)
    labels = jax.random.randint(k_lab, (B,), 0, 2, dtype=jnp.int32)

    loss, prob = my_auto_model_forward(params, input_ids, labels,
                                       loss_weight=LOSS_WEIGHT)
    prob_only = my_auto_model_forward(params, input_ids, None,
                                      loss_weight=LOSS_WEIGHT)

    jax.block_until_ready((loss, prob, prob_only))
    assert prob.shape == (B, NL) and prob_only.shape == (B, NL)
    assert loss.shape == ()
    print("KERNEL_OK")
</pallas_src>

<mosaic_0001>
module attributes {stable_mosaic.version = 11 : i64} {
  func.func @fused_block_kernel(%arg0: i32, %arg1: memref<1x8x32xbf16, #tpu.memory_space<vmem>>, %arg2: memref<1x1x8xf32, #tpu.memory_space<vmem>>, %arg3: memref<2xf32, #tpu.memory_space<smem>>, %arg4: memref<32x96xbf16, #tpu.memory_space<vmem>>, %arg5: memref<1x96xf32, #tpu.memory_space<vmem>>, %arg6: memref<32x32xbf16, #tpu.memory_space<vmem>>, %arg7: memref<1x32xf32, #tpu.memory_space<vmem>>, %arg8: memref<1x32xf32, #tpu.memory_space<vmem>>, %arg9: memref<1x32xf32, #tpu.memory_space<vmem>>, %arg10: memref<32x64xbf16, #tpu.memory_space<vmem>>, %arg11: memref<1x64xf32, #tpu.memory_space<vmem>>, %arg12: memref<64x32xbf16, #tpu.memory_space<vmem>>, %arg13: memref<1x32xf32, #tpu.memory_space<vmem>>, %arg14: memref<1x32xf32, #tpu.memory_space<vmem>>, %arg15: memref<1x32xf32, #tpu.memory_space<vmem>>, %arg16: memref<32x128xbf16, #tpu.memory_space<vmem>>, %arg17: memref<1x128xf32, #tpu.memory_space<vmem>>, %arg18: memref<1x1x128xf32, #tpu.memory_space<vmem>>, %arg19: memref<1x1x128xf32, #tpu.memory_space<vmem>>) attributes {dimension_semantics = [#tpu.dimension_semantics<parallel>], iteration_bounds = array<i64: 2>, scalar_prefetch = 0 : i64, scratch_operands = 0 : i64, tpu.core_type = #tpu.core_type<tc>, window_params = [{transform_indices = @transform_0, window_bounds = array<i64: 1, 8, 32>}, {transform_indices = @transform_1, window_bounds = array<i64: 1, 1, 8>}, {transform_indices = @transform_2, window_bounds = array<i64: 2>}, {pipeline_mode = #tpu.pipeline_mode<synchronous>, transform_indices = @transform_3, window_bounds = array<i64: 32, 96>}, {pipeline_mode = #tpu.pipeline_mode<synchronous>, transform_indices = @transform_4, window_bounds = array<i64: 1, 96>}, {pipeline_mode = #tpu.pipeline_mode<synchronous>, transform_indices = @transform_5, window_bounds = array<i64: 32, 32>}, {pipeline_mode = #tpu.pipeline_mode<synchronous>, transform_indices = @transform_6, window_bounds = array<i64: 1, 32>}, {pipeline_mode = #tpu.pipeline_mode<synchronous>, transform_indices = @transform_7, window_bounds = array<i64: 1, 32>}, {pipeline_mode = #tpu.pipeline_mode<synchronous>, transform_indices = @transform_8, window_bounds = array<i64: 1, 32>}, {pipeline_mode = #tpu.pipeline_mode<synchronous>, transform_indices = @transform_9, window_bounds = array<i64: 32, 64>}, {pipeline_mode = #tpu.pipeline_mode<synchronous>, transform_indices = @transform_10, window_bounds = array<i64: 1, 64>}, {pipeline_mode = #tpu.pipeline_mode<synchronous>, transform_indices = @transform_11, window_bounds = array<i64: 64, 32>}, {pipeline_mode = #tpu.pipeline_mode<synchronous>, transform_indices = @transform_12, window_bounds = array<i64: 1, 32>}, {pipeline_mode = #tpu.pipeline_mode<synchronous>, transform_indices = @transform_13, window_bounds = array<i64: 1, 32>}, {pipeline_mode = #tpu.pipeline_mode<synchronous>, transform_indices = @transform_14, window_bounds = array<i64: 1, 32>}, {pipeline_mode = #tpu.pipeline_mode<synchronous>, transform_indices = @transform_15, window_bounds = array<i64: 32, 128>}, {pipeline_mode = #tpu.pipeline_mode<synchronous>, transform_indices = @transform_16, window_bounds = array<i64: 1, 128>}, {transform_indices = @transform_17, window_bounds = array<i64: 1, 1, 128>}, {transform_indices = @transform_18, window_bounds = array<i64: 1, 1, 128>}]} {
    %c0 = arith.constant 0 : index
    %c0_0 = arith.constant 0 : index
    %c0_1 = arith.constant 0 : index
    %0 = vector.load %arg1[%c0, %c0_0, %c0_1] : memref<1x8x32xbf16, #tpu.memory_space<vmem>>, vector<1x8x32xbf16>
    %1 = vector.shape_cast %0 : vector<1x8x32xbf16> to vector<8x32xbf16>
    %2 = arith.extf %1 : vector<8x32xbf16> to vector<8x32xf32>
    %c0_2 = arith.constant 0 : index
    %c0_3 = arith.constant 0 : index
    %3 = vector.load %arg4[%c0_2, %c0_3] : memref<32x96xbf16, #tpu.memory_space<vmem>>, vector<32x96xbf16>
    %cst = arith.constant dense<0.000000e+00> : vector<8x96xf32>
    %4 = tpu.matmul %1, %3, %cst {dimension_numbers = #tpu.dot_dimension_numbers<[1], [0], [0], [1], [0, 0, 1, 1], [], []>} : vector<8x32xbf16>, vector<32x96xbf16>, vector<8x96xf32> -> vector<8x96xf32>
    %c0_4 = arith.constant 0 : index
    %c0_5 = arith.constant 0 : index
    %5 = vector.load %arg5[%c0_4, %c0_5] : memref<1x96xf32, #tpu.memory_space<vmem>>, vector<1x96xf32>
    %6 = vector.broadcast %5 : vector<1x96xf32> to vector<8x96xf32>
    %7 = arith.addf %4, %6 : vector<8x96xf32>
    %8 = vector.extract_strided_slice %7 {offsets = [0, 0], sizes = [8, 32], strides = [1, 1]} : vector<8x96xf32> to vector<8x32xf32>
    %9 = vector.extract_strided_slice %7 {offsets = [0, 32], sizes = [8, 32], strides = [1, 1]} : vector<8x96xf32> to vector<8x32xf32>
    %10 = vector.extract_strided_slice %7 {offsets = [0, 64], sizes = [8, 32], strides = [1, 1]} : vector<8x96xf32> to vector<8x32xf32>
    %11 = arith.truncf %8 : vector<8x32xf32> to vector<8x32xbf16>
    %12 = arith.truncf %9 : vector<8x32xf32> to vector<8x32xbf16>
    %cst_6 = arith.constant dense<0.000000e+00> : vector<8x8xf32>
    %13 = tpu.matmul %11, %12, %cst_6 {dimension_numbers = #tpu.dot_dimension_numbers<[1], [1], [0], [0], [0, 0, 1, 0], [], []>} : vector<8x32xbf16>, vector<8x32xbf16>, vector<8x8xf32> -> vector<8x8xf32>
    %c0_7 = arith.constant 0 : index
    %c0_8 = arith.constant 0 : index
    %c0_9 = arith.constant 0 : index
    %14 = vector.load %arg2[%c0_7, %c0_8, %c0_9] : memref<1x1x8xf32, #tpu.memory_space<vmem>>, vector<1x1x8xf32>
    %15 = vector.shape_cast %14 : vector<1x1x8xf32> to vector<1x8xf32>
    %16 = vector.broadcast %15 : vector<1x8xf32> to vector<8x8xf32>
    %17 = arith.addf %13, %16 : vector<8x8xf32>
    %cst_10 = arith.constant dense<0xFF800000> : vector<8xf32>
    %18 = vector.multi_reduction <maximumf>, %17, %cst_10 [1] : vector<8x8xf32> to vector<8xf32>
    %19 = vector.shape_cast %18 : vector<8xf32> to vector<8x1xf32>
    %20 = vector.broadcast %19 : vector<8x1xf32> to vector<8x8xf32>
    %21 = arith.subf %17, %20 : vector<8x8xf32>
    %22 = math.exp %21 : vector<8x8xf32>
    %cst_11 = arith.constant dense<0.000000e+00> : vector<8xf32>
    %23 = vector.multi_reduction <add>, %22, %cst_11 [1] : vector<8x8xf32> to vector<8xf32>
    %24 = vector.shape_cast %23 : vector<8xf32> to vector<8x1xf32>
    %25 = arith.truncf %22 : vector<8x8xf32> to vector<8x8xbf16>
    %26 = arith.truncf %10 : vector<8x32xf32> to vector<8x32xbf16>
    %cst_12 = arith.constant dense<0.000000e+00> : vector<8x32xf32>
    %27 = tpu.matmul %25, %26, %cst_12 {dimension_numbers = #tpu.dot_dimension_numbers<[1], [0], [0], [1], [0, 0, 1, 1], [], []>} : vector<8x8xbf16>, vector<8x32xbf16>, vector<8x32xf32> -> vector<8x32xf32>
    %28 = tpu.reciprocal %24 {approx = true} : vector<8x1xf32> -> vector<8x1xf32>
    %29 = vector.broadcast %28 : vector<8x1xf32> to vector<8x32xf32>
    %30 = arith.mulf %27, %29 : vector<8x32xf32>
    %31 = arith.truncf %30 : vector<8x32xf32> to vector<8x32xbf16>
    %c0_13 = arith.constant 0 : index
    %c0_14 = arith.constant 0 : index
    %32 = vector.load %arg6[%c0_13, %c0_14] : memref<32x32xbf16, #tpu.memory_space<vmem>>, vector<32x32xbf16>
    %cst_15 = arith.constant dense<0.000000e+00> : vector<8x32xf32>
    %33 = tpu.matmul %31, %32, %cst_15 {dimension_numbers = #tpu.dot_dimension_numbers<[1], [0], [0], [1], [0, 0, 1, 1], [], []>} : vector<8x32xbf16>, vector<32x32xbf16>, vector<8x32xf32> -> vector<8x32xf32>
    %c0_16 = arith.constant 0 : index
    %c0_17 = arith.constant 0 : index
    %34 = vector.load %arg7[%c0_16, %c0_17] : memref<1x32xf32, #tpu.memory_space<vmem>>, vector<1x32xf32>
    %35 = vector.broadcast %34 : vector<1x32xf32> to vector<8x32xf32>
    %36 = arith.addf %33, %35 : vector<8x32xf32>
    %37 = arith.addf %2, %36 : vector<8x32xf32>
    %cst_18 = arith.constant dense<0.000000e+00> : vector<8xf32>
    %38 = vector.multi_reduction <add>, %37, %cst_18 [1] : vector<8x32xf32> to vector<8xf32>
    %39 = vector.shape_cast %38 : vector<8xf32> to vector<8x1xf32>
    %cst_19 = arith.constant 3.200000e+01 : f32
    %40 = vector.broadcast %cst_19 : f32 to vector<8x1xf32>
    %41 = arith.divf %39, %40 : vector<8x1xf32>
    %42 = vector.broadcast %41 : vector<8x1xf32> to vector<8x32xf32>
    %43 = arith.subf %37, %42 : vector<8x32xf32>
    %44 = arith.mulf %43, %43 : vector<8x32xf32>
    %cst_20 = arith.constant dense<0.000000e+00> : vector<8xf32>
    %45 = vector.multi_reduction <add>, %44, %cst_20 [1] : vector<8x32xf32> to vector<8xf32>
    %46 = vector.shape_cast %45 : vector<8xf32> to vector<8x1xf32>
    %cst_21 = arith.constant 3.200000e+01 : f32
    %47 = vector.broadcast %cst_21 : f32 to vector<8x1xf32>
    %48 = arith.divf %46, %47 : vector<8x1xf32>
    %49 = vector.broadcast %41 : vector<8x1xf32> to vector<8x32xf32>
    %50 = arith.subf %37, %49 : vector<8x32xf32>
    %cst_22 = arith.constant 9.99999974E-6 : f32
    %51 = vector.broadcast %cst_22 : f32 to vector<8x1xf32>
    %52 = arith.addf %48, %51 : vector<8x1xf32>
    %53 = math.rsqrt %52 : vector<8x1xf32>
    %54 = vector.broadcast %53 : vector<8x1xf32> to vector<8x32xf32>
    %55 = arith.mulf %50, %54 : vector<8x32xf32>
    %c0_23 = arith.constant 0 : index
    %c0_24 = arith.constant 0 : index
    %56 = vector.load %arg8[%c0_23, %c0_24] : memref<1x32xf32, #tpu.memory_space<vmem>>, vector<1x32xf32>
    %57 = vector.broadcast %56 : vector<1x32xf32> to vector<8x32xf32>
    %58 = arith.mulf %55, %57 : vector<8x32xf32>
    %c0_25 = arith.constant 0 : index
    %c0_26 = arith.constant 0 : index
    %59 = vector.load %arg9[%c0_25, %c0_26] : memref<1x32xf32, #tpu.memory_space<vmem>>, vector<1x32xf32>
    %60 = vector.broadcast %59 : vector<1x32xf32> to vector<8x32xf32>
    %61 = arith.addf %58, %60 : vector<8x32xf32>
    %62 = arith.truncf %61 : vector<8x32xf32> to vector<8x32xbf16>
    %c0_27 = arith.constant 0 : index
    %c0_28 = arith.constant 0 : index
    %63 = vector.load %arg10[%c0_27, %c0_28] : memref<32x64xbf16, #tpu.memory_space<vmem>>, vector<32x64xbf16>
    %cst_29 = arith.constant dense<0.000000e+00> : vector<8x64xf32>
    %64 = tpu.matmul %62, %63, %cst_29 {dimension_numbers = #tpu.dot_dimension_numbers<[1], [0], [0], [1], [0, 0, 1, 1], [], []>} : vector<8x32xbf16>, vector<32x64xbf16>, vector<8x64xf32> -> vector<8x64xf32>
    %c0_30 = arith.constant 0 : index
    %c0_31 = arith.constant 0 : index
    %65 = vector.load %arg11[%c0_30, %c0_31] : memref<1x64xf32, #tpu.memory_space<vmem>>, vector<1x64xf32>
    %66 = vector.broadcast %65 : vector<1x64xf32> to vector<8x64xf32>
    %67 = arith.addf %64, %66 : vector<8x64xf32>
    %68 = arith.mulf %67, %67 : vector<8x64xf32>
    %69 = arith.mulf %67, %68 : vector<8x64xf32>
    %cst_32 = arith.constant 4.471500e-02 : f32
    %70 = vector.broadcast %cst_32 : f32 to vector<8x64xf32>
    %71 = arith.mulf %70, %69 : vector<8x64xf32>
    %72 = arith.addf %67, %71 : vector<8x64xf32>
    %cst_33 = arith.constant 0.797884583 : f32
    %73 = vector.broadcast %cst_33 : f32 to vector<8x64xf32>
    %74 = arith.mulf %73, %72 : vector<8x64xf32>
    %75 = math.tanh %74 : vector<8x64xf32>
    %cst_34 = arith.constant 1.000000e+00 : f32
    %76 = vector.broadcast %cst_34 : f32 to vector<8x64xf32>
    %77 = arith.addf %76, %75 : vector<8x64xf32>
    %cst_35 = arith.constant 5.000000e-01 : f32
    %78 = vector.broadcast %cst_35 : f32 to vector<8x64xf32>
    %79 = arith.mulf %78, %77 : vector<8x64xf32>
    %80 = arith.mulf %67, %79 : vector<8x64xf32>
    %81 = arith.truncf %80 : vector<8x64xf32> to vector<8x64xbf16>
    %c0_36 = arith.constant 0 : index
    %c0_37 = arith.constant 0 : index
    %82 = vector.load %arg12[%c0_36, %c0_37] : memref<64x32xbf16, #tpu.memory_space<vmem>>, vector<64x32xbf16>
    %cst_38 = arith.constant dense<0.000000e+00> : vector<8x32xf32>
    %83 = tpu.matmul %81, %82, %cst_38 {dimension_numbers = #tpu.dot_dimension_numbers<[1], [0], [0], [1], [0, 0, 1, 1], [], []>} : vector<8x64xbf16>, vector<64x32xbf16>, vector<8x32xf32> -> vector<8x32xf32>
    %c0_39 = arith.constant 0 : index
    %c0_40 = arith.constant 0 : index
    %84 = vector.load %arg13[%c0_39, %c0_40] : memref<1x32xf32, #tpu.memory_space<vmem>>, vector<1x32xf32>
    %85 = vector.broadcast %84 : vector<1x32xf32> to vector<8x32xf32>
    %86 = arith.addf %83, %85 : vector<8x32xf32>
    %87 = arith.addf %61, %86 : vector<8x32xf32>
    %cst_41 = arith.constant dense<0.000000e+00> : vector<8xf32>
    %88 = vector.multi_reduction <add>, %87, %cst_41 [1] : vector<8x32xf32> to vector<8xf32>
    %89 = vector.shape_cast %88 : vector<8xf32> to vector<8x1xf32>
    %cst_42 = arith.constant 3.200000e+01 : f32
    %90 = vector.broadcast %cst_42 : f32 to vector<8x1xf32>
    %91 = arith.divf %89, %90 : vector<8x1xf32>
    %92 = vector.broadcast %91 : vector<8x1xf32> to vector<8x32xf32>
    %93 = arith.subf %87, %92 : vector<8x32xf32>
    %94 = arith.mulf %93, %93 : vector<8x32xf32>
    %cst_43 = arith.constant dense<0.000000e+00> : vector<8xf32>
    %95 = vector.multi_reduction <add>, %94, %cst_43 [1] : vector<8x32xf32> to vector<8xf32>
    %96 = vector.shape_cast %95 : vector<8xf32> to vector<8x1xf32>
    %cst_44 = arith.constant 3.200000e+01 : f32
    %97 = vector.broadcast %cst_44 : f32 to vector<8x1xf32>
    %98 = arith.divf %96, %97 : vector<8x1xf32>
    %99 = vector.broadcast %91 : vector<8x1xf32> to vector<8x32xf32>
    %100 = arith.subf %87, %99 : vector<8x32xf32>
    %cst_45 = arith.constant 9.99999974E-6 : f32
    %101 = vector.broadcast %cst_45 : f32 to vector<8x1xf32>
    %102 = arith.addf %98, %101 : vector<8x1xf32>
    %103 = math.rsqrt %102 : vector<8x1xf32>
    %104 = vector.broadcast %103 : vector<8x1xf32> to vector<8x32xf32>
    %105 = arith.mulf %100, %104 : vector<8x32xf32>
    %c0_46 = arith.constant 0 : index
    %c0_47 = arith.constant 0 : index
    %106 = vector.load %arg14[%c0_46, %c0_47] : memref<1x32xf32, #tpu.memory_space<vmem>>, vector<1x32xf32>
    %107 = vector.broadcast %106 : vector<1x32xf32> to vector<8x32xf32>
    %108 = arith.mulf %105, %107 : vector<8x32xf32>
    %c0_48 = arith.constant 0 : index
    %c0_49 = arith.constant 0 : index
    %109 = vector.load %arg15[%c0_48, %c0_49] : memref<1x32xf32, #tpu.memory_space<vmem>>, vector<1x32xf32>
    %110 = vector.broadcast %109 : vector<1x32xf32> to vector<8x32xf32>
    %111 = arith.addf %108, %110 : vector<8x32xf32>
    %112 = vector.extract_strided_slice %111 {offsets = [0, 0], sizes = [1, 32], strides = [1, 1]} : vector<8x32xf32> to vector<1x32xf32>
    %113 = arith.truncf %112 : vector<1x32xf32> to vector<1x32xbf16>
    %c0_50 = arith.constant 0 : index
    %c0_51 = arith.constant 0 : index
    %114 = vector.load %arg16[%c0_50, %c0_51] : memref<32x128xbf16, #tpu.memory_space<vmem>>, vector<32x128xbf16>
    %cst_52 = arith.constant dense<0.000000e+00> : vector<1x128xf32>
    %115 = tpu.matmul %113, %114, %cst_52 {dimension_numbers = #tpu.dot_dimension_numbers<[1], [0], [0], [1], [0, 0, 1, 1], [], []>} : vector<1x32xbf16>, vector<32x128xbf16>, vector<1x128xf32> -> vector<1x128xf32>
    %c0_53 = arith.constant 0 : index
    %c0_54 = arith.constant 0 : index
    %116 = vector.load %arg17[%c0_53, %c0_54] : memref<1x128xf32, #tpu.memory_space<vmem>>, vector<1x128xf32>
    %117 = arith.addf %115, %116 : vector<1x128xf32>
    %118 = arith.negf %117 : vector<1x128xf32>
    %119 = math.exp %118 : vector<1x128xf32>
    %cst_55 = arith.constant 1.000000e+00 : f32
    %120 = vector.broadcast %cst_55 : f32 to vector<1x128xf32>
    %121 = arith.addf %120, %119 : vector<1x128xf32>
    %122 = arith.divf %120, %121 : vector<1x128xf32>
    %c0_56 = arith.constant 0 : index
    %c0_57 = arith.constant 0 : index
    %c0_58 = arith.constant 0 : index
    %123 = vector.load %arg18[%c0_56, %c0_57, %c0_58] : memref<1x1x128xf32, #tpu.memory_space<vmem>>, vector<1x1x128xf32>
    %124 = vector.shape_cast %123 : vector<1x1x128xf32> to vector<1x128xf32>
    %125 = vector.shape_cast %122 : vector<1x128xf32> to vector<1x1x128xf32>
    tpu.vector_store %arg18[%c0_56, %c0_57, %c0_58], %125 {strides = array<i32>} : memref<1x1x128xf32, #tpu.memory_space<vmem>>, vector<1x1x128xf32>,
    %126 = arith.index_cast %arg0 : i32 to index
    %127 = memref.load %arg3[%126] : memref<2xf32, #tpu.memory_space<smem>>
    %128 = vector.extract_strided_slice %117 {offsets = [0, 0], sizes = [1, 1], strides = [1, 1]} : vector<1x128xf32> to vector<1x1xf32>
    %cst_59 = arith.constant 0.000000e+00 : f32
    %129 = vector.broadcast %cst_59 : f32 to vector<1x1xf32>
    %130 = arith.minimumf %128, %129 : vector<1x1xf32>
    %131 = math.absf %128 : vector<1x1xf32>
    %cst_60 = arith.constant 0.000000e+00 : f32
    %132 = vector.broadcast %cst_60 : f32 to vector<1x1xf32>
    %133 = arith.subf %132, %131 : vector<1x1xf32>
    %134 = math.exp %133 : vector<1x1xf32>
    %cst_61 = arith.constant 1.000000e+00 : f32
    %135 = vector.broadcast %cst_61 : f32 to vector<1x1xf32>
    %136 = arith.addf %135, %134 : vector<1x1xf32>
    %137 = math.log %136 : vector<1x1xf32>
    %138 = arith.subf %130, %137 : vector<1x1xf32>
    %cst_62 = arith.constant 0.000000e+00 : f32
    %139 = vector.broadcast %cst_62 : f32 to vector<1x1xf32>
    %140 = arith.subf %139, %128 : vector<1x1xf32>
    %cst_63 = arith.constant 0.000000e+00 : f32
    %141 = vector.broadcast %cst_63 : f32 to vector<1x1xf32>
    %142 = arith.minimumf %140, %141 : vector<1x1xf32>
    %143 = math.absf %128 : vector<1x1xf32>
    %cst_64 = arith.constant 0.000000e+00 : f32
    %144 = vector.broadcast %cst_64 : f32 to vector<1x1xf32>
    %145 = arith.subf %144, %143 : vector<1x1xf32>
    %146 = math.exp %145 : vector<1x1xf32>
    %cst_65 = arith.constant 1.000000e+00 : f32
    %147 = vector.broadcast %cst_65 : f32 to vector<1x1xf32>
    %148 = arith.addf %147, %146 : vector<1x1xf32>
    %149 = math.log %148 : vector<1x1xf32>
    %150 = arith.subf %142, %149 : vector<1x1xf32>
    %cst_66 = arith.constant -23.0258503 : f32
    %151 = vector.broadcast %cst_66 : f32 to vector<1x1xf32>
    %152 = arith.maximumf %138, %151 : vector<1x1xf32>
    %cst_67 = arith.constant -23.0258503 : f32
    %153 = vector.broadcast %cst_67 : f32 to vector<1x1xf32>
    %154 = arith.maximumf %150, %153 : vector<1x1xf32>
    %cst_68 = arith.constant 1.500000e+00 : f32
    %155 = vector.broadcast %cst_68 : f32 to vector<1x1xf32>
    %156 = arith.mulf %155, %152 : vector<1x1xf32>
    %157 = vector.broadcast %127 : f32 to vector<1x1xf32>
    %158 = arith.mulf %156, %157 : vector<1x1xf32>
    %cst_69 = arith.constant 1.000000e+00 : f32
    %159 = arith.subf %cst_69, %127 : f32
    %160 = vector.broadcast %159 : f32 to vector<1x1xf32>
    %161 = arith.mulf %154, %160 : vector<1x1xf32>
    %162 = arith.addf %158, %161 : vector<1x1xf32>
    %163 = vector.shape_cast %162 : vector<1x1xf32> to vector<1x1xf32>
    %164 = vector.broadcast %163 : vector<1x1xf32> to vector<1x128xf32>
    %c0_70 = arith.constant 0 : index
    %c0_71 = arith.constant 0 : index
    %c0_72 = arith.constant 0 : index
    %165 = vector.load %arg19[%c0_70, %c0_71, %c0_72] : memref<1x1x128xf32, #tpu.memory_space<vmem>>, vector<1x1x128xf32>
    %166 = vector.shape_cast %165 : vector<1x1x128xf32> to vector<1x128xf32>
    %167 = vector.shape_cast %164 : vector<1x128xf32> to vector<1x1x128xf32>
    tpu.vector_store %arg19[%c0_70, %c0_71, %c0_72], %167 {strides = array<i32>} : memref<1x1x128xf32, #tpu.memory_space<vmem>>, vector<1x1x128xf32>,
    return
  }
  func.func @transform_0(%arg0: i32) -> (i32, i32, i32) {
    %c0_i32 = arith.constant 0 : i32
    %c0_i32_0 = arith.constant 0 : i32
    %c0_i32_1 = arith.constant 0 : i32
    return %arg0, %c0_i32, %c0_i32_0 : i32, i32, i32
  }
  func.func @transform_1(%arg0: i32) -> (i32, i32, i32) {
    %c0_i32 = arith.constant 0 : i32
    %c0_i32_0 = arith.constant 0 : i32
    %c0_i32_1 = arith.constant 0 : i32
    return %arg0, %c0_i32, %c0_i32_0 : i32, i32, i32
  }
  func.func @transform_2(%arg0: i32) -> i32 {
    %c0_i32 = arith.constant 0 : i32
    %c0_i32_0 = arith.constant 0 : i32
    return %c0_i32 : i32
  }
  func.func @transform_3(%arg0: i32) -> (i32, i32) {
    %c0_i32 = arith.constant 0 : i32
    %c0_i32_0 = arith.constant 0 : i32
    %c0_i32_1 = arith.constant 0 : i32
    return %c0_i32, %c0_i32_0 : i32, i32
  }
  func.func @transform_4(%arg0: i32) -> (i32, i32) {
    %c0_i32 = arith.constant 0 : i32
    %c0_i32_0 = arith.constant 0 : i32
    %c0_i32_1 = arith.constant 0 : i32
    return %c0_i32, %c0_i32_0 : i32, i32
  }
  func.func @transform_5(%arg0: i32) -> (i32, i32) {
    %c0_i32 = arith.constant 0 : i32
    %c0_i32_0 = arith.constant 0 : i32
    %c0_i32_1 = arith.constant 0 : i32
    return %c0_i32, %c0_i32_0 : i32, i32
  }
  func.func @transform_6(%arg0: i32) -> (i32, i32) {
    %c0_i32 = arith.constant 0 : i32
    %c0_i32_0 = arith.constant 0 : i32
    %c0_i32_1 = arith.constant 0 : i32
    return %c0_i32, %c0_i32_0 : i32, i32
  }
  func.func @transform_7(%arg0: i32) -> (i32, i32) {
    %c0_i32 = arith.constant 0 : i32
    %c0_i32_0 = arith.constant 0 : i32
    %c0_i32_1 = arith.constant 0 : i32
    return %c0_i32, %c0_i32_0 : i32, i32
  }
  func.func @transform_8(%arg0: i32) -> (i32, i32) {
    %c0_i32 = arith.constant 0 : i32
    %c0_i32_0 = arith.constant 0 : i32
    %c0_i32_1 = arith.constant 0 : i32
    return %c0_i32, %c0_i32_0 : i32, i32
  }
  func.func @transform_9(%arg0: i32) -> (i32, i32) {
    %c0_i32 = arith.constant 0 : i32
    %c0_i32_0 = arith.constant 0 : i32
    %c0_i32_1 = arith.constant 0 : i32
    return %c0_i32, %c0_i32_0 : i32, i32
  }
  func.func @transform_10(%arg0: i32) -> (i32, i32) {
    %c0_i32 = arith.constant 0 : i32
    %c0_i32_0 = arith.constant 0 : i32
    %c0_i32_1 = arith.constant 0 : i32
    return %c0_i32, %c0_i32_0 : i32, i32
  }
  func.func @transform_11(%arg0: i32) -> (i32, i32) {
    %c0_i32 = arith.constant 0 : i32
    %c0_i32_0 = arith.constant 0 : i32
    %c0_i32_1 = arith.constant 0 : i32
    return %c0_i32, %c0_i32_0 : i32, i32
  }
  func.func @transform_12(%arg0: i32) -> (i32, i32) {
    %c0_i32 = arith.constant 0 : i32
    %c0_i32_0 = arith.constant 0 : i32
    %c0_i32_1 = arith.constant 0 : i32
    return %c0_i32, %c0_i32_0 : i32, i32
  }
  func.func @transform_13(%arg0: i32) -> (i32, i32) {
    %c0_i32 = arith.constant 0 : i32
    %c0_i32_0 = arith.constant 0 : i32
    %c0_i32_1 = arith.constant 0 : i32
    return %c0_i32, %c0_i32_0 : i32, i32
  }
  func.func @transform_14(%arg0: i32) -> (i32, i32) {
    %c0_i32 = arith.constant 0 : i32
    %c0_i32_0 = arith.constant 0 : i32
    %c0_i32_1 = arith.constant 0 : i32
    return %c0_i32, %c0_i32_0 : i32, i32
  }
  func.func @transform_15(%arg0: i32) -> (i32, i32) {
    %c0_i32 = arith.constant 0 : i32
    %c0_i32_0 = arith.constant 0 : i32
    %c0_i32_1 = arith.constant 0 : i32
    return %c0_i32, %c0_i32_0 : i32, i32
  }
  func.func @transform_16(%arg0: i32) -> (i32, i32) {
    %c0_i32 = arith.constant 0 : i32
    %c0_i32_0 = arith.constant 0 : i32
    %c0_i32_1 = arith.constant 0 : i32
    return %c0_i32, %c0_i32_0 : i32, i32
  }
  func.func @transform_17(%arg0: i32) -> (i32, i32, i32) {
    %c0_i32 = arith.constant 0 : i32
    %c0_i32_0 = arith.constant 0 : i32
    %c0_i32_1 = arith.constant 0 : i32
    return %arg0, %c0_i32, %c0_i32_0 : i32, i32, i32
  }
  func.func @transform_18(%arg0: i32) -> (i32, i32, i32) {
    %c0_i32 = arith.constant 0 : i32
    %c0_i32_0 = arith.constant 0 : i32
    %c0_i32_1 = arith.constant 0 : i32
    return %arg0, %c0_i32, %c0_i32_0 : i32, i32, i32
  }
}

</mosaic_0001>

<llo_original>
// kernel: tpu_custom_call.1
$region0: #{tpu_custom_call.1}
  #allocation0 [shape = 'u32[]', space=smem, size = 0x4, offset = 0x4, fixed_abs, tag = 'smem constant byte address 0x4 - core index']
  #allocation1 [shape = 'u32[144,128]{1,0:T(1,128)}', space=vmem, size = 0x12000, scoped, tag = 'internal scratch']
  %s0 = inlined_call_operand.hbm [shape: bf16[2,8,32], index: 0, kind: input, shape index: {}]
  %s1 = inlined_call_operand.hbm [shape: f32[2,1,8], index: 1, kind: input, shape index: {}]
  %s2 = inlined_call_operand.hbm [shape: f32[2], index: 2, kind: input, shape index: {}]
  %s3 = inlined_call_operand.vmem [shape: bf16[32,96], index: 3, kind: input, shape index: {}]
  %s4 = inlined_call_operand.hbm [shape: f32[1,96], index: 4, kind: input, shape index: {}]
  %s5 = inlined_call_operand.vmem [shape: bf16[32,32], index: 5, kind: input, shape index: {}]
  %s6 = inlined_call_operand.hbm [shape: f32[1,32], index: 6, kind: input, shape index: {}]
  %s7 = inlined_call_operand.hbm [shape: f32[1,32], index: 7, kind: input, shape index: {}]
  %s8 = inlined_call_operand.hbm [shape: f32[1,32], index: 8, kind: input, shape index: {}]
  %s9 = inlined_call_operand.vmem [shape: bf16[32,64], index: 9, kind: input, shape index: {}]
  %s10 = inlined_call_operand.vmem [shape: f32[1,64], index: 10, kind: input, shape index: {}]
  %s11 = inlined_call_operand.vmem [shape: bf16[64,32], index: 11, kind: input, shape index: {}]
  %s12 = inlined_call_operand.vmem [shape: f32[1,32], index: 12, kind: input, shape index: {}]
  %s13 = inlined_call_operand.vmem [shape: f32[1,32], index: 13, kind: input, shape index: {}]
  %s14 = inlined_call_operand.vmem [shape: f32[1,32], index: 14, kind: input, shape index: {}]
  %s15 = inlined_call_operand.vmem [shape: bf16[32,128], index: 15, kind: input, shape index: {}]
  %s16 = inlined_call_operand.vmem [shape: f32[1,128], index: 16, kind: input, shape index: {}]
  %s17 = inlined_call_operand.hbm [shape: f32[2,1,128], index: 17, kind: output, shape index: {0}]
  %s18 = inlined_call_operand.hbm [shape: f32[2,1,128], index: 18, kind: output, shape index: {1}]
  %19 = xla_tuple %s17, %s18
  %s20 = sld [smem:[#allocation0]]
  $region137: #{tpu_custom_call.1} parent=0
    _
  %s22 = ssub.s32 1, %s20
  %s23 = scalar_select 0, %s22, %s20
  $region1: #{tpu_custom_call.1} parent=0
    #allocation2 [shape = 'u8[4096]{0}', space=vmem, size = 0x1000, scoped, tag = 'input window, operand 0']
    #allocation3 [shape = 's32[2]{0}', space=sflag, size = 0x8, scoped, tag = 'scoped memory for tpu_custom_call.1']
    #allocation4 [shape = 's32[2]{0}', space=sflag, size = 0x8, scoped, tag = 'scoped memory for tpu_custom_call.1']
    #allocation5 [shape = 's32[2]{0}', space=sflag, size = 0x8, scoped, tag = 'scoped memory for tpu_custom_call.1']
    #allocation6 [shape = 'u8[1024]{0}', space=vmem, size = 0x400, scoped, tag = 'input window, operand 1']
    #allocation7 [shape = 's32[2]{0}', space=sflag, size = 0x8, scoped, tag = 'scoped memory for tpu_custom_call.1']
    #allocation8 [shape = 'u8[512]{0}', space=smem, size = 0x200, scoped, tag = 'input window, operand 2, single buffered']
    #allocation9 [shape = 'u8[512]{0}', space=vmem, size = 0x400, scoped, tag = 'input window, operand 4, single buffered']
    #allocation10 [shape = 'u8[512]{0}', space=vmem, size = 0x400, scoped, tag = 'input window, operand 6, single buffered']
    #allocation11 [shape = 's32[1]{0}', space=sflag, size = 0x4, scoped, tag = 'scoped memory for tpu_custom_call.1']
    #allocation12 [shape = 'u8[512]{0}', space=vmem, size = 0x400, scoped, tag = 'input window, operand 7, single buffered']
    #allocation13 [shape = 'u8[512]{0}', space=vmem, size = 0x400, scoped, tag = 'input window, operand 8, single buffered']
    #allocation14 [shape = 's32[1]{0}', space=sflag, size = 0x4, scoped, tag = 'scoped memory for tpu_custom_call.1']
    #allocation15 [shape = 'u8[1024]{0}', space=vmem, size = 0x400, scoped, tag = 'output window, operand 0']
    #allocation16 [shape = 'u8[1024]{0}', space=vmem, size = 0x400, scoped, tag = 'output window, operand 1']
    #allocation17 [shape = 's32[2]{0}', space=sflag, size = 0x8, scoped, tag = 'scoped memory for tpu_custom_call.1']
    %24 = vsyncpa [#allocation3], 0
    %s25 = scalar_lea.sflag [#allocation3], 1
    %26 = vsyncpa %s25, 0
    %27 = vsyncpa [#allocation7], 0
    %s28 = scalar_lea.sflag [#allocation7], 1
    %29 = vsyncpa %s28, 0
    %30 = vsyncpa [#allocation5], 0
    %31 = vsyncpa [#allocation11], 0
    %32 = vsyncpa [#allocation14], 0
    %33 = vsyncpa [#allocation4], 0
    %s34 = scalar_lea.sflag [#allocation4], 1
    %35 = vsyncpa %s34, 0
    %36 = vsyncpa [#allocation17], 0
    %s37 = scalar_lea.sflag [#allocation17], 1
    %38 = vsyncpa %s37, 0
    loop: start=0, step=1, limit=4
    $region2: #{tpu_custom_call.1} parent=1 // loop_pre_header
      _
    $region3: #{tpu_custom_call.1} parent=1 // loop_header
      %s40 = sphi 0, %s44
      %p41 = scmp.ge.s32.totalorder %s40, 4
      %s50 = sphi 0, %s52
      %s53 = sphi 0, %s50
      %s54 = sphi 0, %s53
      %s70 = sphi 0, %s54
      %s76 = sphi 0, %s78
      %s79 = sphi 0, %s76
      %s80 = sphi 0, %s79
      %s96 = sphi 0, %s80
      %s100 = sphi 0, %s100
      %s102 = sphi 0, %s100
      %s103 = sphi 0, %s102
      %s117 = sphi 0, %s103
      %s121 = sphi 0, %s121
      %s123 = sphi 0, %s121
      %s124 = sphi 0, %s123
      %s138 = sphi 0, %s124
      %s142 = sphi 0, %s142
      %s144 = sphi 0, %s142
      %s145 = sphi 0, %s144
      %s159 = sphi 0, %s145
      %s163 = sphi 0, %s163
      %s165 = sphi 0, %s163
      %s166 = sphi 0, %s165
      %s180 = sphi 0, %s166
      %s184 = sphi 0, %s184
      %s186 = sphi 0, %s184
      %s187 = sphi 0, %s186
      %s201 = sphi 0, %s187
      %s205 = sphi 0, %s205
      %s207 = sphi 0, %s205
      %s208 = sphi 0, %s207
      %s222 = sphi 0, %s208
      %s226 = sphi 0, %s226
      %s228 = sphi 0, %s226
      %s229 = sphi 0, %s228
      %s243 = sphi 0, %s229
      %s247 = sphi 0, %s247
      %s249 = sphi 0, %s247
      %s250 = sphi 0, %s249
      %s264 = sphi 0, %s250
      %s268 = sphi 0, %s268
      %s270 = sphi 0, %s268
      %s271 = sphi 0, %s270
      %s285 = sphi 0, %s271
      %s289 = sphi 0, %s289
      %s291 = sphi 0, %s289
      %s292 = sphi 0, %s291
      %s306 = sphi 0, %s292
      %s310 = sphi 0, %s310
      %s312 = sphi 0, %s310
      %s313 = sphi 0, %s312
      %s327 = sphi 0, %s313
      %s331 = sphi 0, %s331
      %s333 = sphi 0, %s331
      %s334 = sphi 0, %s333
      %s348 = sphi 0, %s334
      %s352 = sphi 0, %s352
      %s354 = sphi 0, %s352
      %s355 = sphi 0, %s354
      %s369 = sphi 0, %s355
      %s373 = sphi 0, %s373
      %s375 = sphi 0, %s373
      %s376 = sphi 0, %s375
      %s390 = sphi 0, %s376
      %s394 = sphi 0, %s394
      %s396 = sphi 0, %s394
      %s397 = sphi 0, %s396
      %s411 = sphi 0, %s397
      %s417 = sphi 0, %s419
      %s420 = sphi 0, %s417
      %s421 = sphi 0, %s420
      %s437 = sphi 0, %s421
      %s443 = sphi 0, %s445
      %s446 = sphi 0, %s443
      %s447 = sphi 0, %s446
      %s463 = sphi 0, %s447
    $region4: #{tpu_custom_call.1} parent=1 // loop_header_branch
      %43 = sbr.rel (%p41) target = $region8
    $region5: #{tpu_custom_call.1} parent=1 // loop_body
      %s45 = ssub.s32 %s40, 1
      %s46 = ssub.s32 %s40, 2
      %s47 = sadd.s32 %s40, 1
      %s48 = ssub.s32 %s40, %s47
      %p49 = scmp.eq.s32.totalorder %s48, 0
      %s51 = sadd.s32 %s50, 1
      %s52 = scalar_select %p49, %s50, %s51
      %p55 = pneg %p49
      %p56 = scmp.eq.s32.totalorder %s40, 1
      %p57 = por %p55, %p56
      %p58 = scmp.ne.s32.totalorder %s50, %s53
      %p59 = scmp.eq.s32.totalorder %s40, 0
      %p60 = por %p58, %p59
      %p61 = scmp.ne.s32.totalorder %s50, %s53
      %p62 = scmp.eq.s32.totalorder %s45, 1
      %p63 = por %p61, %p62
      %p64 = scmp.ne.s32.totalorder %s53, %s54
      %p65 = scmp.eq.s32.totalorder %s45, 0
      %p66 = por %p64, %p65
      %p67 = scmp.ne.s32.totalorder %s53, %s54
      %p68 = scmp.eq.s32.totalorder %s46, 1
      %p69 = por %p67, %p68
      %p71 = scmp.ne.s32.totalorder %s54, %s70
      %p72 = scmp.eq.s32.totalorder %s46, 0
      %p73 = por %p71, %p72
      %s74 = ssub.s32 %s40, %s47
      %p75 = scmp.eq.s32.totalorder %s74, 0
      %s77 = sadd.s32 %s76, 1
      %s78 = scalar_select %p75, %s76, %s77
      %p81 = pneg %p75
      %p82 = scmp.eq.s32.totalorder %s40, 1
      %p83 = por %p81, %p82
      %p84 = scmp.ne.s32.totalorder %s76, %s79
      %p85 = scmp.eq.s32.totalorder %s40, 0
      %p86 = por %p84, %p85
      %p87 = scmp.ne.s32.totalorder %s76, %s79
      %p88 = scmp.eq.s32.totalorder %s45, 1
      %p89 = por %p87, %p88
      %p90 = scmp.ne.s32.totalorder %s79, %s80
      %p91 = scmp.eq.s32.totalorder %s45, 0
      %p92 = por %p90, %p91
      %p93 = scmp.ne.s32.totalorder %s79, %s80
      %p94 = scmp.eq.s32.totalorder %s46, 1
      %p95 = por %p93, %p94
      %p97 = scmp.ne.s32.totalorder %s80, %s96
      %p98 = scmp.eq.s32.totalorder %s46, 0
      %p99 = por %p97, %p98
      %s101 = sadd.s32 %s100, 1
      %p104 = scmp.eq.s32.totalorder %s40, 1
      %p105 = scmp.ne.s32.totalorder %s100, %s102
      %p106 = scmp.eq.s32.totalorder %s40, 0
      %p107 = por %p105, %p106
      %p108 = scmp.ne.s32.totalorder %s100, %s102
      %p109 = scmp.eq.s32.totalorder %s45, 1
      %p110 = por %p108, %p109
      %p111 = scmp.ne.s32.totalorder %s102, %s103
      %p112 = scmp.eq.s32.totalorder %s45, 0
      %p113 = por %p111, %p112
      %p114 = scmp.ne.s32.totalorder %s102, %s103
      %p115 = scmp.eq.s32.totalorder %s46, 1
      %p116 = por %p114, %p115
      %p118 = scmp.ne.s32.totalorder %s103, %s117
      %p119 = scmp.eq.s32.totalorder %s46, 0
      %p120 = por %p118, %p119
      %s122 = sadd.s32 %s121, 1
      %p125 = scmp.eq.s32.totalorder %s40, 1
      %p126 = scmp.ne.s32.totalorder %s121, %s123
      %p127 = scmp.eq.s32.totalorder %s40, 0
      %p128 = por %p126, %p127
      %p129 = scmp.ne.s32.totalorder %s121, %s123
      %p130 = scmp.eq.s32.totalorder %s45, 1
      %p131 = por %p129, %p130
      %p132 = scmp.ne.s32.totalorder %s123, %s124
      %p133 = scmp.eq.s32.totalorder %s45, 0
      %p134 = por %p132, %p133
      %p135 = scmp.ne.s32.totalorder %s123, %s124
      %p136 = scmp.eq.s32.totalorder %s46, 1
      %p137 = por %p135, %p136
      %p139 = scmp.ne.s32.totalorder %s124, %s138
      %p140 = scmp.eq.s32.totalorder %s46, 0
      %p141 = por %p139, %p140
      %s143 = sadd.s32 %s142, 1
      %p146 = scmp.eq.s32.totalorder %s40, 1
      %p147 = scmp.ne.s32.totalorder %s142, %s144
      %p148 = scmp.eq.s32.totalorder %s40, 0
      %p149 = por %p147, %p148
      %p150 = scmp.ne.s32.totalorder %s142, %s144
      %p151 = scmp.eq.s32.totalorder %s45, 1
      %p152 = por %p150, %p151
      %p153 = scmp.ne.s32.totalorder %s144, %s145
      %p154 = scmp.eq.s32.totalorder %s45, 0
      %p155 = por %p153, %p154
      %p156 = scmp.ne.s32.totalorder %s144, %s145
      %p157 = scmp.eq.s32.totalorder %s46, 1
      %p158 = por %p156, %p157
      %p160 = scmp.ne.s32.totalorder %s145, %s159
      %p161 = scmp.eq.s32.totalorder %s46, 0
      %p162 = por %p160, %p161
      %s164 = sadd.s32 %s163, 1
      %p167 = scmp.eq.s32.totalorder %s40, 1
      %p168 = scmp.ne.s32.totalorder %s163, %s165
      %p169 = scmp.eq.s32.totalorder %s40, 0
      %p170 = por %p168, %p169
      %p171 = scmp.ne.s32.totalorder %s163, %s165
      %p172 = scmp.eq.s32.totalorder %s45, 1
      %p173 = por %p171, %p172
      %p174 = scmp.ne.s32.totalorder %s165, %s166
      %p175 = scmp.eq.s32.totalorder %s45, 0
      %p176 = por %p174, %p175
      %p177 = scmp.ne.s32.totalorder %s165, %s166
      %p178 = scmp.eq.s32.totalorder %s46, 1
      %p179 = por %p177, %p178
      %p181 = scmp.ne.s32.totalorder %s166, %s180
      %p182 = scmp.eq.s32.totalorder %s46, 0
      %p183 = por %p181, %p182
      %s185 = sadd.s32 %s184, 1
      %p188 = scmp.eq.s32.totalorder %s40, 1
      %p189 = scmp.ne.s32.totalorder %s184, %s186
      %p190 = scmp.eq.s32.totalorder %s40, 0
      %p191 = por %p189, %p190
      %p192 = scmp.ne.s32.totalorder %s184, %s186
      %p193 = scmp.eq.s32.totalorder %s45, 1
      %p194 = por %p192, %p193
      %p195 = scmp.ne.s32.totalorder %s186, %s187
      %p196 = scmp.eq.s32.totalorder %s45, 0
      %p197 = por %p195, %p196
      %p198 = scmp.ne.s32.totalorder %s186, %s187
      %p199 = scmp.eq.s32.totalorder %s46, 1
      %p200 = por %p198, %p199
      %p202 = scmp.ne.s32.totalorder %s187, %s201
      %p203 = scmp.eq.s32.totalorder %s46, 0
      %p204 = por %p202, %p203
      %s206 = sadd.s32 %s205, 1
      %p209 = scmp.eq.s32.totalorder %s40, 1
      %p210 = scmp.ne.s32.totalorder %s205, %s207
      %p211 = scmp.eq.s32.totalorder %s40, 0
      %p212 = por %p210, %p211
      %p213 = scmp.ne.s32.totalorder %s205, %s207
      %p214 = scmp.eq.s32.totalorder %s45, 1
      %p215 = por %p213, %p214
      %p216 = scmp.ne.s32.totalorder %s207, %s208
      %p217 = scmp.eq.s32.totalorder %s45, 0
      %p218 = por %p216, %p217
      %p219 = scmp.ne.s32.totalorder %s207, %s208
      %p220 = scmp.eq.s32.totalorder %s46, 1
      %p221 = por %p219, %p220
      %p223 = scmp.ne.s32.totalorder %s208, %s222
      %p224 = scmp.eq.s32.totalorder %s46, 0
      %p225 = por %p223, %p224
      %s227 = sadd.s32 %s226, 1
      %p230 = scmp.eq.s32.totalorder %s40, 1
      %p231 = scmp.ne.s32.totalorder %s226, %s228
      %p232 = scmp.eq.s32.totalorder %s40, 0
      %p233 = por %p231, %p232
      %p234 = scmp.ne.s32.totalorder %s226, %s228
      %p235 = scmp.eq.s32.totalorder %s45, 1
      %p236 = por %p234, %p235
      %p237 = scmp.ne.s32.totalorder %s228, %s229
      %p238 = scmp.eq.s32.totalorder %s45, 0
      %p239 = por %p237, %p238
      %p240 = scmp.ne.s32.totalorder %s228, %s229
      %p241 = scmp.eq.s32.totalorder %s46, 1
      %p242 = por %p240, %p241
      %p244 = scmp.ne.s32.totalorder %s229, %s243
      %p245 = scmp.eq.s32.totalorder %s46, 0
      %p246 = por %p244, %p245
      %s248 = sadd.s32 %s247, 1
      %p251 = scmp.eq.s32.totalorder %s40, 1
      %p252 = scmp.ne.s32.totalorder %s247, %s249
      %p253 = scmp.eq.s32.totalorder %s40, 0
      %p254 = por %p252, %p253
      %p255 = scmp.ne.s32.totalorder %s247, %s249
      %p256 = scmp.eq.s32.totalorder %s45, 1
      %p257 = por %p255, %p256
      %p258 = scmp.ne.s32.totalorder %s249, %s250
      %p259 = scmp.eq.s32.totalorder %s45, 0
      %p260 = por %p258, %p259
      %p261 = scmp.ne.s32.totalorder %s249, %s250
      %p262 = scmp.eq.s32.totalorder %s46, 1
      %p263 = por %p261, %p262
      %p265 = scmp.ne.s32.totalorder %s250, %s264
      %p266 = scmp.eq.s32.totalorder %s46, 0
      %p267 = por %p265, %p266
      %s269 = sadd.s32 %s268, 1
      %p272 = scmp.eq.s32.totalorder %s40, 1
      %p273 = scmp.ne.s32.totalorder %s268, %s270
      %p274 = scmp.eq.s32.totalorder %s40, 0
      %p275 = por %p273, %p274
      %p276 = scmp.ne.s32.totalorder %s268, %s270
      %p277 = scmp.eq.s32.totalorder %s45, 1
      %p278 = por %p276, %p277
      %p279 = scmp.ne.s32.totalorder %s270, %s271
      %p280 = scmp.eq.s32.totalorder %s45, 0
      %p281 = por %p279, %p280
      %p282 = scmp.ne.s32.totalorder %s270, %s271
      %p283 = scmp.eq.s32.totalorder %s46, 1
      %p284 = por %p282, %p283
      %p286 = scmp.ne.s32.totalorder %s271, %s285
      %p287 = scmp.eq.s32.totalorder %s46, 0
      %p288 = por %p286, %p287
      %s290 = sadd.s32 %s289, 1
      %p293 = scmp.eq.s32.totalorder %s40, 1
      %p294 = scmp.ne.s32.totalorder %s289, %s291
      %p295 = scmp.eq.s32.totalorder %s40, 0
      %p296 = por %p294, %p295
      %p297 = scmp.ne.s32.totalorder %s289, %s291
      %p298 = scmp.eq.s32.totalorder %s45, 1
      %p299 = por %p297, %p298
      %p300 = scmp.ne.s32.totalorder %s291, %s292
      %p301 = scmp.eq.s32.totalorder %s45, 0
      %p302 = por %p300, %p301
      %p303 = scmp.ne.s32.totalorder %s291, %s292
      %p304 = scmp.eq.s32.totalorder %s46, 1
      %p305 = por %p303, %p304
      %p307 = scmp.ne.s32.totalorder %s292, %s306
      %p308 = scmp.eq.s32.totalorder %s46, 0
      %p309 = por %p307, %p308
      %s311 = sadd.s32 %s310, 1
      %p314 = scmp.eq.s32.totalorder %s40, 1
      %p315 = scmp.ne.s32.totalorder %s310, %s312
      %p316 = scmp.eq.s32.totalorder %s40, 0
      %p317 = por %p315, %p316
      %p318 = scmp.ne.s32.totalorder %s310, %s312
      %p319 = scmp.eq.s32.totalorder %s45, 1
      %p320 = por %p318, %p319
      %p321 = scmp.ne.s32.totalorder %s312, %s313
      %p322 = scmp.eq.s32.totalorder %s45, 0
      %p323 = por %p321, %p322
      %p324 = scmp.ne.s32.totalorder %s312, %s313
      %p325 = scmp.eq.s32.totalorder %s46, 1
      %p326 = por %p324, %p325
      %p328 = scmp.ne.s32.totalorder %s313, %s327
      %p329 = scmp.eq.s32.totalorder %s46, 0
      %p330 = por %p328, %p329
      %s332 = sadd.s32 %s331, 1
      %p335 = scmp.eq.s32.totalorder %s40, 1
      %p336 = scmp.ne.s32.totalorder %s331, %s333
      %p337 = scmp.eq.s32.totalorder %s40, 0
      %p338 = por %p336, %p337
      %p339 = scmp.ne.s32.totalorder %s331, %s333
      %p340 = scmp.eq.s32.totalorder %s45, 1
      %p341 = por %p339, %p340
      %p342 = scmp.ne.s32.totalorder %s333, %s334
      %p343 = scmp.eq.s32.totalorder %s45, 0
      %p344 = por %p342, %p343
      %p345 = scmp.ne.s32.totalorder %s333, %s334
      %p346 = scmp.eq.s32.totalorder %s46, 1
      %p347 = por %p345, %p346
      %p349 = scmp.ne.s32.totalorder %s334, %s348
      %p350 = scmp.eq.s32.totalorder %s46, 0
      %p351 = por %p349, %p350
      %s353 = sadd.s32 %s352, 1
      %p356 = scmp.eq.s32.totalorder %s40, 1
      %p357 = scmp.ne.s32.totalorder %s352, %s354
      %p358 = scmp.eq.s32.totalorder %s40, 0
      %p359 = por %p357, %p358
      %p360 = scmp.ne.s32.totalorder %s352, %s354
      %p361 = scmp.eq.s32.totalorder %s45, 1
      %p362 = por %p360, %p361
      %p363 = scmp.ne.s32.totalorder %s354, %s355
      %p364 = scmp.eq.s32.totalorder %s45, 0
      %p365 = por %p363, %p364
      %p366 = scmp.ne.s32.totalorder %s354, %s355
      %p367 = scmp.eq.s32.totalorder %s46, 1
      %p368 = por %p366, %p367
      %p370 = scmp.ne.s32.totalorder %s355, %s369
      %p371 = scmp.eq.s32.totalorder %s46, 0
      %p372 = por %p370, %p371
      %s374 = sadd.s32 %s373, 1
      %p377 = scmp.eq.s32.totalorder %s40, 1
      %p378 = scmp.ne.s32.totalorder %s373, %s375
      %p379 = scmp.eq.s32.totalorder %s40, 0
      %p380 = por %p378, %p379
      %p381 = scmp.ne.s32.totalorder %s373, %s375
      %p382 = scmp.eq.s32.totalorder %s45, 1
      %p383 = por %p381, %p382
      %p384 = scmp.ne.s32.totalorder %s375, %s376
      %p385 = scmp.eq.s32.totalorder %s45, 0
      %p386 = por %p384, %p385
      %p387 = scmp.ne.s32.totalorder %s375, %s376
      %p388 = scmp.eq.s32.totalorder %s46, 1
      %p389 = por %p387, %p388
      %p391 = scmp.ne.s32.totalorder %s376, %s390
      %p392 = scmp.eq.s32.totalorder %s46, 0
      %p393 = por %p391, %p392
      %s395 = sadd.s32 %s394, 1
      %p398 = scmp.eq.s32.totalorder %s40, 1
      %p399 = scmp.ne.s32.totalorder %s394, %s396
      %p400 = scmp.eq.s32.totalorder %s40, 0
      %p401 = por %p399, %p400
      %p402 = scmp.ne.s32.totalorder %s394, %s396
      %p403 = scmp.eq.s32.totalorder %s45, 1
      %p404 = por %p402, %p403
      %p405 = scmp.ne.s32.totalorder %s396, %s397
      %p406 = scmp.eq.s32.totalorder %s45, 0
      %p407 = por %p405, %p406
      %p408 = scmp.ne.s32.totalorder %s396, %s397
      %p409 = scmp.eq.s32.totalorder %s46, 1
      %p410 = por %p408, %p409
      %p412 = scmp.ne.s32.totalorder %s397, %s411
      %p413 = scmp.eq.s32.totalorder %s46, 0
      %p414 = por %p412, %p413
      %s415 = ssub.s32 %s40, %s47
      %p416 = scmp.eq.s32.totalorder %s415, 0
      %s418 = sadd.s32 %s417, 1
      %s419 = scalar_select %p416, %s417, %s418
      %p422 = pneg %p416
      %p423 = scmp.eq.s32.totalorder %s40, 1
      %p424 = por %p422, %p423
      %p425 = scmp.ne.s32.totalorder %s417, %s420
      %p426 = scmp.eq.s32.totalorder %s40, 0
      %p427 = por %p425, %p426
      %p428 = scmp.ne.s32.totalorder %s417, %s420
      %p429 = scmp.eq.s32.totalorder %s45, 1
      %p430 = por %p428, %p429
      %p431 = scmp.ne.s32.totalorder %s420, %s421
      %p432 = scmp.eq.s32.totalorder %s45, 0
      %p433 = por %p431, %p432
      %p434 = scmp.ne.s32.totalorder %s420, %s421
      %p435 = scmp.eq.s32.totalorder %s46, 1
      %p436 = por %p434, %p435
      %p438 = scmp.ne.s32.totalorder %s421, %s437
      %p439 = scmp.eq.s32.totalorder %s46, 0
      %p440 = por %p438, %p439
      %s441 = ssub.s32 %s40, %s47
      %p442 = scmp.eq.s32.totalorder %s441, 0
      %s444 = sadd.s32 %s443, 1
      %s445 = scalar_select %p442, %s443, %s444
      %p448 = pneg %p442
      %p449 = scmp.eq.s32.totalorder %s40, 1
      %p450 = por %p448, %p449
      %p451 = scmp.ne.s32.totalorder %s443, %s446
      %p452 = scmp.eq.s32.totalorder %s40, 0
      %p453 = por %p451, %p452
      %p454 = scmp.ne.s32.totalorder %s443, %s446
      %p455 = scmp.eq.s32.totalorder %s45, 1
      %p456 = por %p454, %p455
      %p457 = scmp.ne.s32.totalorder %s446, %s447
      %p458 = scmp.eq.s32.totalorder %s45, 0
      %p459 = por %p457, %p458
      %p460 = scmp.ne.s32.totalorder %s446, %s447
      %p461 = scmp.eq.s32.totalorder %s46, 1
      %p462 = por %p460, %p461
      %p464 = scmp.ne.s32.totalorder %s447, %s463
      %p465 = scmp.eq.s32.totalorder %s46, 0
      %p466 = por %p464, %p465
      %p467 = scmp.le.s32.totalorder 1, %s40
      %p468 = scmp.lt.s32.totalorder %s40, 3
      %p469 = pnand %p467, %p468
      %p470 = pneg %p469
      // Predicated region
      $region9: #{tpu_custom_call.1} parent=5 // pred_check
        _
      $region10: #{tpu_custom_call.1} parent=5 // pred_check_branch
        %472 = sbr.rel (%p469) target = $region12
      $region11: #{tpu_custom_call.1} parent=5 // pred_region
        %s473 = ssub.s32 %s40, 1
        // Predicated region
        $region13: #{tpu_custom_call.1} parent=11 // pred_check
          %p474 = pneg %p113
        $region14: #{tpu_custom_call.1} parent=11 // pred_check_branch
          %476 = sbr.rel (%p474) target = $region16
        $region15: #{tpu_custom_call.1} parent=11 // pred_region
          %s478 = ssub.s32 16, 16
          %479 = vsyncadd [#allocation5], %s478
          %482 = dma.hbm_to_smem %s2, 16, [#allocation8], [#allocation5]
        $region16: #{tpu_custom_call.1} parent=11 // pred_fallthru
          _
        // Predicated region
        $region17: #{tpu_custom_call.1} parent=11 // pred_check
          %p483 = pneg %p134
        $region18: #{tpu_custom_call.1} parent=11 // pred_check_branch
          %485 = sbr.rel (%p483) target = $region20
        $region19: #{tpu_custom_call.1} parent=11 // pred_region
          _
        $region20: #{tpu_custom_call.1} parent=11 // pred_fallthru
          _
        // Predicated region
        $region21: #{tpu_custom_call.1} parent=11 // pred_check
          %p486 = pneg %p155
        $region22: #{tpu_custom_call.1} parent=11 // pred_check_branch
          %488 = sbr.rel (%p486) target = $region24
        $region23: #{tpu_custom_call.1} parent=11 // pred_region
          %s490 = ssub.s32 16, 16
          %491 = vsyncadd [#allocation7], %s490
          %s493 = sshll.u32 [#allocation9], 4
          %s494 = int_to_ptr.vmem [resolvable:$true] %s493
          %496 = dma.hbm_to_vmem [thread:$0]  %s4, 16, %s494, [#allocation7]
        $region24: #{tpu_custom_call.1} parent=11 // pred_fallthru
          _
        // Predicated region
        $region25: #{tpu_custom_call.1} parent=11 // pred_check
          %p497 = pneg %p176
        $region26: #{tpu_custom_call.1} parent=11 // pred_check_branch
          %499 = sbr.rel (%p497) target = $region28
        $region27: #{tpu_custom_call.1} parent=11 // pred_region
          _
        $region28: #{tpu_custom_call.1} parent=11 // pred_fallthru
          _
        // Predicated region
        $region29: #{tpu_custom_call.1} parent=11 // pred_check
          %p500 = pneg %p197
        $region30: #{tpu_custom_call.1} parent=11 // pred_check_branch
          %502 = sbr.rel (%p500) target = $region32
        $region31: #{tpu_custom_call.1} parent=11 // pred_region
          %s504 = ssub.s32 16, 16
          %505 = vsyncadd [#allocation11], %s504
          %s507 = sshll.u32 [#allocation10], 4
          %s508 = int_to_ptr.vmem [resolvable:$true] %s507
          %510 = dma.hbm_to_vmem [thread:$0]  %s6, 16, %s508, [#allocation11]
        $region32: #{tpu_custom_call.1} parent=11 // pred_fallthru
          _
        // Predicated region
        $region33: #{tpu_custom_call.1} parent=11 // pred_check
          %p511 = pneg %p218
        $region34: #{tpu_custom_call.1} parent=11 // pred_check_branch
          %513 = sbr.rel (%p511) target = $region36
        $region35: #{tpu_custom_call.1} parent=11 // pred_region
          %s515 = ssub.s32 16, 16
          %516 = vsyncadd [#allocation11], %s515
          %s518 = sshll.u32 [#allocation12], 4
          %s519 = int_to_ptr.vmem [resolvable:$true] %s518
          %521 = dma.hbm_to_vmem [thread:$0]  %s7, 16, %s519, [#allocation11]
        $region36: #{tpu_custom_call.1} parent=11 // pred_fallthru
          _
        // Predicated region
        $region37: #{tpu_custom_call.1} parent=11 // pred_check
          %p522 = pneg %p239
        $region38: #{tpu_custom_call.1} parent=11 // pred_check_branch
          %524 = sbr.rel (%p522) target = $region40
        $region39: #{tpu_custom_call.1} parent=11 // pred_region
          %s526 = ssub.s32 16, 16
          %527 = vsyncadd [#allocation14], %s526
          %s529 = sshll.u32 [#allocation13], 4
          %s530 = int_to_ptr.vmem [resolvable:$true] %s529
          %532 = dma.hbm_to_vmem [thread:$0]  %s8, 16, %s530, [#allocation14]
        $region40: #{tpu_custom_call.1} parent=11 // pred_fallthru
          _
        // Predicated region
        $region41: #{tpu_custom_call.1} parent=11 // pred_check
          %p533 = pneg %p260
        $region42: #{tpu_custom_call.1} parent=11 // pred_check_branch
          %535 = sbr.rel (%p533) target = $region44
        $region43: #{tpu_custom_call.1} parent=11 // pred_region
          _
        $region44: #{tpu_custom_call.1} parent=11 // pred_fallthru
          _
        // Predicated region
        $region45: #{tpu_custom_call.1} parent=11 // pred_check
          %p536 = pneg %p281
        $region46: #{tpu_custom_call.1} parent=11 // pred_check_branch
          %538 = sbr.rel (%p536) target = $region48
        $region47: #{tpu_custom_call.1} parent=11 // pred_region
          _
        $region48: #{tpu_custom_call.1} parent=11 // pred_fallthru
          _
        // Predicated region
        $region49: #{tpu_custom_call.1} parent=11 // pred_check
          %p539 = pneg %p302
        $region50: #{tpu_custom_call.1} parent=11 // pred_check_branch
          %541 = sbr.rel (%p539) target = $region52
        $region51: #{tpu_custom_call.1} parent=11 // pred_region
          _
        $region52: #{tpu_custom_call.1} parent=11 // pred_fallthru
          _
        // Predicated region
        $region53: #{tpu_custom_call.1} parent=11 // pred_check
          %p542 = pneg %p323
        $region54: #{tpu_custom_call.1} parent=11 // pred_check_branch
          %544 = sbr.rel (%p542) target = $region56
        $region55: #{tpu_custom_call.1} parent=11 // pred_region
          _
        $region56: #{tpu_custom_call.1} parent=11 // pred_fallthru
          _
        // Predicated region
        $region57: #{tpu_custom_call.1} parent=11 // pred_check
          %p545 = pneg %p344
        $region58: #{tpu_custom_call.1} parent=11 // pred_check_branch
          %547 = sbr.rel (%p545) target = $region60
        $region59: #{tpu_custom_call.1} parent=11 // pred_region
          _
        $region60: #{tpu_custom_call.1} parent=11 // pred_fallthru
          _
        // Predicated region
        $region61: #{tpu_custom_call.1} parent=11 // pred_check
          %p548 = pneg %p365
        $region62: #{tpu_custom_call.1} parent=11 // pred_check_branch
          %550 = sbr.rel (%p548) target = $region64
        $region63: #{tpu_custom_call.1} parent=11 // pred_region
          _
        $region64: #{tpu_custom_call.1} parent=11 // pred_fallthru
          _
        // Predicated region
        $region65: #{tpu_custom_call.1} parent=11 // pred_check
          %p551 = pneg %p386
        $region66: #{tpu_custom_call.1} parent=11 // pred_check_branch
          %553 = sbr.rel (%p551) target = $region68
        $region67: #{tpu_custom_call.1} parent=11 // pred_region
          _
        $region68: #{tpu_custom_call.1} parent=11 // pred_fallthru
          _
        // Predicated region
        $region69: #{tpu_custom_call.1} parent=11 // pred_check
          %p554 = pneg %p407
        $region70: #{tpu_custom_call.1} parent=11 // pred_check_branch
          %556 = sbr.rel (%p554) target = $region72
        $region71: #{tpu_custom_call.1} parent=11 // pred_region
          _
        $region72: #{tpu_custom_call.1} parent=11 // pred_fallthru
          _
      $region12: #{tpu_custom_call.1} parent=5 // pred_fallthru
        _
      %p557 = scmp.lt.s32.totalorder %s40, 2
      // Predicated region
      $region73: #{tpu_custom_call.1} parent=5 // pred_check
        %p558 = pneg %p557
      $region74: #{tpu_custom_call.1} parent=5 // pred_check_branch
        %560 = sbr.rel (%p558) target = $region76
      $region75: #{tpu_custom_call.1} parent=5 // pred_region
        // Predicated region
        $region77: #{tpu_custom_call.1} parent=75 // pred_check
          %p561 = pneg %p60
        $region78: #{tpu_custom_call.1} parent=75 // pred_check_branch
          %563 = sbr.rel (%p561) target = $region80
        $region79: #{tpu_custom_call.1} parent=75 // pred_region
          %s564 = sand.u32 %s50, 1
          %s565 = scalar_lea.sflag [#allocation3], %s564
          %s566 = sand.u32 %s50, 1
          %s567 = smul.addr %s566, 4
          %s568 = scalar_lea.vmem [#allocation2], %s567
          %s570 = ssub.s32 64, 64
          %571 = vsyncadd %s565, %s570
          %s572 = smul.addr %s40, 64
          %s573 = scalar_lea.hbm %s0, %s572
          %s575 = sshll.u32 %s568, 4
          %s576 = int_to_ptr.vmem [resolvable:$true] %s575
          %578 = dma.hbm_to_vmem [thread:$0]  %s573, 64, %s576, %s565
        $region80: #{tpu_custom_call.1} parent=75 // pred_fallthru
          _
        // Predicated region
        $region81: #{tpu_custom_call.1} parent=75 // pred_check
          %p579 = pneg %p86
        $region82: #{tpu_custom_call.1} parent=75 // pred_check_branch
          %581 = sbr.rel (%p579) target = $region84
        $region83: #{tpu_custom_call.1} parent=75 // pred_region
          %s582 = sand.u32 %s40, 1
          %s583 = scalar_lea.sflag [#allocation7], %s582
          %s584 = sand.u32 %s76, 1
          %s585 = scalar_lea.vmem [#allocation6], %s584
          %s587 = ssub.s32 16, 16
          %588 = vsyncadd %s583, %s587
          %s589 = smul.addr %s40, 16
          %s590 = scalar_lea.hbm %s1, %s589
          %s592 = sshll.u32 %s585, 4
          %s593 = int_to_ptr.vmem [resolvable:$true] %s592
          %595 = dma.hbm_to_vmem [thread:$0]  %s590, 16, %s593, %s583
        $region84: #{tpu_custom_call.1} parent=75 // pred_fallthru
          _
      $region76: #{tpu_custom_call.1} parent=5 // pred_fallthru
        _
      %p596 = scmp.le.s32.totalorder 1, %s40
      %p597 = scmp.lt.s32.totalorder %s40, 3
      %p598 = pnand %p596, %p597
      %p599 = pneg %p598
      // Predicated region
      $region85: #{tpu_custom_call.1} parent=5 // pred_check
        _
      $region86: #{tpu_custom_call.1} parent=5 // pred_check_branch
        %601 = sbr.rel (%p598) target = $region88
      $region87: #{tpu_custom_call.1} parent=5 // pred_region
        %s602 = ssub.s32 %s40, 1
        %s603 = sand.u32 %s53, 1
        %s604 = scalar_lea.sflag [#allocation3], %s603
        %s605 = sand.u32 %s53, 1
        %s606 = smul.addr %s605, 4
        %s607 = scalar_lea.vmem [#allocation2], %s606
        // Predicated region
        $region89: #{tpu_custom_call.1} parent=87 // pred_check
          %p608 = pneg %p66
        $region90: #{tpu_custom_call.1} parent=87 // pred_check_branch
          %610 = sbr.rel (%p608) target = $region92
        $region91: #{tpu_custom_call.1} parent=87 // pred_region
          %611 = dma.done %s604, 64
        $region92: #{tpu_custom_call.1} parent=87 // pred_fallthru
          _
        %s612 = sand.u32 %s45, 1
        %s613 = scalar_lea.sflag [#allocation7], %s612
        %s614 = sand.u32 %s79, 1
        %s615 = scalar_lea.vmem [#allocation6], %s614
        // Predicated region
        $region93: #{tpu_custom_call.1} parent=87 // pred_check
          %p616 = pneg %p92
        $region94: #{tpu_custom_call.1} parent=87 // pred_check_branch
          %618 = sbr.rel (%p616) target = $region96
        $region95: #{tpu_custom_call.1} parent=87 // pred_region
          %619 = dma.done %s613, 16
        $region96: #{tpu_custom_call.1} parent=87 // pred_fallthru
          _
        // Predicated region
        $region97: #{tpu_custom_call.1} parent=87 // pred_check
          %p620 = pneg %p113
        $region98: #{tpu_custom_call.1} parent=87 // pred_check_branch
          %622 = sbr.rel (%p620) target = $region100
        $region99: #{tpu_custom_call.1} parent=87 // pred_region
          %623 = dma.done [#allocation5], 16
        $region100: #{tpu_custom_call.1} parent=87 // pred_fallthru
          _
        // Predicated region
        $region101: #{tpu_custom_call.1} parent=87 // pred_check
          %p624 = pneg %p155
        $region102: #{tpu_custom_call.1} parent=87 // pred_check_branch
          %626 = sbr.rel (%p624) target = $region104
        $region103: #{tpu_custom_call.1} parent=87 // pred_region
          %627 = dma.done [#allocation7], 16
        $region104: #{tpu_custom_call.1} parent=87 // pred_fallthru
          _
        // Predicated region
        $region105: #{tpu_custom_call.1} parent=87 // pred_check
          %p628 = pneg %p197
        $region106: #{tpu_custom_call.1} parent=87 // pred_check_branch
          %630 = sbr.rel (%p628) target = $region108
        $region107: #{tpu_custom_call.1} parent=87 // pred_region
          %631 = dma.done [#allocation11], 16
        $region108: #{tpu_custom_call.1} parent=87 // pred_fallthru
          _
        // Predicated region
        $region109: #{tpu_custom_call.1} parent=87 // pred_check
          %p632 = pneg %p218
        $region110: #{tpu_custom_call.1} parent=87 // pred_check_branch
          %634 = sbr.rel (%p632) target = $region112
        $region111: #{tpu_custom_call.1} parent=87 // pred_region
          %635 = dma.done [#allocation11], 16
        $region112: #{tpu_custom_call.1} parent=87 // pred_fallthru
          _
        // Predicated region
        $region113: #{tpu_custom_call.1} parent=87 // pred_check
          %p636 = pneg %p239
        $region114: #{tpu_custom_call.1} parent=87 // pred_check_branch
          %638 = sbr.rel (%p636) target = $region116
        $region115: #{tpu_custom_call.1} parent=87 // pred_region
          %639 = dma.done [#allocation14], 16
        $region116: #{tpu_custom_call.1} parent=87 // pred_fallthru
          _
        %640 = sfence
        %s641 = sand.u32 %s53, 1
        %s642 = scalar_lea.sflag [#allocation3], %s641
        %s643 = sand.u32 %s53, 1
        %s644 = smul.addr %s643, 4
        %s645 = scalar_lea.vmem [#allocation2], %s644
        %p646 = pneg %p66
        %p647 = pneg %p63
        %s648 = sand.u32 %s45, 1
        %s649 = scalar_lea.sflag [#allocation7], %s648
        %s650 = sand.u32 %s79, 1
        %s651 = scalar_lea.vmem [#allocation6], %s650
        %p652 = pneg %p92
        %p653 = pneg %p89
        %p654 = pneg %p113
        %p655 = pneg %p110
        %p656 = pneg %p134
        %p657 = pneg %p131
        %p658 = pneg %p155
        %p659 = pneg %p152
        %p660 = pneg %p176
        %p661 = pneg %p173
        %p662 = pneg %p197
        %p663 = pneg %p194
        %p664 = pneg %p218
        %p665 = pneg %p215
        %p666 = pneg %p239
        %p667 = pneg %p236
        %p668 = pneg %p260
        %p669 = pneg %p257
        %p670 = pneg %p281
        %p671 = pneg %p278
        %p672 = pneg %p302
        %p673 = pneg %p299
        %p674 = pneg %p323
        %p675 = pneg %p320
        %p676 = pneg %p344
        %p677 = pneg %p341
        %p678 = pneg %p365
        %p679 = pneg %p362
        %p680 = pneg %p386
        %p681 = pneg %p383
        %p682 = pneg %p407
        %p683 = pneg %p404
        %p684 = pneg %p433
        %p685 = pneg %p430
        %s686 = sand.u32 %s420, 1
        %s687 = scalar_lea.sflag [#allocation4], %s686
        %s688 = sand.u32 %s420, 1
        %s689 = scalar_lea.vmem [#allocation15], %s688
        %p690 = pneg %p459
        %p691 = pneg %p456
        %s692 = sand.u32 %s446, 1
        %s693 = scalar_lea.sflag [#allocation17], %s692
        %s694 = sand.u32 %s446, 1
        %s695 = scalar_lea.vmem [#allocation16], %s694
        %v697 = vld [vmem:[%s607] sm:$0xf]
        %v698 = vunpack.c.l.bf16 %v697
        %v699 = vld [vmem:[%s3] sm:$0xf]
        %v700 = vld [vmem:[%s3 + $0x4] sm:$0xf]
        %v701 = vld [vmem:[%s3 + $0x8] sm:$0xf]
        %v702 = vld [vmem:[%s3 + $0xc] sm:$0xf]
        %v703 = vld [vmem:[#allocation9] sm:$0x1]
        %v705 = vlaneseq
        %v706 = vshrl.u32 %v705, 7
        %v707 = vsub.s32 0, %v706
        %v708 = vrot.slane %v703, %v707
        %v714 = vunpack.c.l.b16 %v699
        %v715 = vunpack.c.l.b16 %v700
        %v716 = vunpack.c.l.b16 %v701
        %v717 = vunpack.c.l.b16 %v702
        %v718 = vpack.c.b16 %v715, %v714
        %v719 = vpack.c.b16 %v717, %v716
        %vm722 = vcmask 261120
        %v724 = vsel %vm722, %v697, 0
        %726 = vmatprep.subr.bf16.mxu0 0
        %727 = vmatpush1.bf16.msra.mxu0 0
        %728 = vmatprep.subr.bf16.mxu0 0
        %729 = vmatpush1.bf16.msra.mxu0 0
        %730 = vmatprep.subr.bf16.mxu0 0
        %731 = vmatpush1.bf16.msra.mxu0 0
        %732 = vmatprep.subr.bf16.mxu0 0
        %733 = vmatpush1.bf16.msra.mxu0 0
        %734 = vmatprep.subr.bf16.mxu0 0
        %735 = vmatpush1.bf16.msra.mxu0 0
        %736 = vmatprep.subr.bf16.mxu0 0
        %737 = vmatpush1.bf16.msra.mxu0 0
        %738 = vmatprep.subr.bf16.mxu0 0
        %739 = vmatpush1.bf16.msra.mxu0 %v719
        %740 = vmatprep.subr.bf16.mxu0 0
        %741 = vmatpush1.bf16.msra.mxu0 %v718
        %742 = vmatprep.subr.bf16.mxu0 0
        %743 = vmatpush2.bf16.msra.mxu0 0
        %744 = vmatprep.subr.bf16.mxu0 0
        %745 = vmatpush2.bf16.msra.mxu0 0
        %746 = vmatprep.subr.bf16.mxu0 0
        %747 = vmatpush2.bf16.msra.mxu0 0
        %748 = vmatprep.subr.bf16.mxu0 0
        %749 = vmatpush2.bf16.msra.mxu0 0
        %750 = vmatprep.subr.bf16.mxu0 0
        %751 = vmatpush2.bf16.msra.mxu0 0
        %752 = vmatprep.subr.bf16.mxu0 0
        %753 = vmatpush2.bf16.msra.mxu0 0
        %754 = vmatprep.subr.bf16.mxu0 0
        %755 = vmatpush2.bf16.msra.mxu0 0
        %756 = vmatprep.subr.bf16.mxu0 0
        %757 = vmatpush2.bf16.msra.mxu0 0
        %758 = vmatprep.mubr.bf16.mxu0 0
        %759 = vmatmul.mubr.bf16.gmra.mxu0 %v724
        %v760 = vpop.f32.mrf.mxu0
        %v761 = vadd.f32 %v708, %v760
        %v762 = vpop.f32.mrf.mxu0
        %v763 = vpop.f32.mrf.mxu0
        %v764 = vpop.f32.mrf.mxu0
        %765 = vdwg.mxu0
        %v766 = vpack.c.bf16 %v761, %v761
        %v767 = vld [vmem:[%s615] sm:$0x1]
        %v769 = vlaneseq
        %v770 = vshrl.u32 %v769, 7
        %v771 = vsub.s32 0, %v770
        %v772 = vrot.slane %v767, %v771
        %775 = vrot.lane.b32.xlu0 %v766, 96
        %v776 = vpop.permute.xlu0 %775
        %v778 = vsel %vm722, %v766, 0
        %v781 = vsel %vm722, %v776, 0
        %783 = vmatprep.subr.bf16.mxu0 0
        %784 = vmatpush1.bf16.xpose.msra.mxu0 0
        %785 = vmatprep.subr.bf16.mxu0 0
        %786 = vmatpush1.bf16.xpose.msra.mxu0 0
        %787 = vmatprep.subr.bf16.mxu0 0
        %788 = vmatpush1.bf16.xpose.msra.mxu0 0
        %789 = vmatprep.subr.bf16.mxu0 0
        %790 = vmatpush1.bf16.xpose.msra.mxu0 0
        %791 = vmatprep.subr.bf16.mxu0 0
        %792 = vmatpush1.bf16.xpose.msra.mxu0 0
        %793 = vmatprep.subr.bf16.mxu0 0
        %794 = vmatpush1.bf16.xpose.msra.mxu0 0
        %795 = vmatprep.subr.bf16.mxu0 0
        %796 = vmatpush1.bf16.xpose.msra.mxu0 0
        %797 = vmatprep.subr.bf16.mxu0 0
        %798 = vmatpush1.bf16.xpose.msra.mxu0 %v781
        %799 = vmatprep.subr.bf16.mxu0 0
        %800 = vmatpush2.bf16.xpose.msra.mxu0 0
        %801 = vmatprep.subr.bf16.mxu0 0
        %802 = vmatpush2.bf16.xpose.msra.mxu0 0
        %803 = vmatprep.subr.bf16.mxu0 0
        %804 = vmatpush2.bf16.xpose.msra.mxu0 0
        %805 = vmatprep.subr.bf16.mxu0 0
        %806 = vmatpush2.bf16.xpose.msra.mxu0 0
        %807 = vmatprep.subr.bf16.mxu0 0
        %808 = vmatpush2.bf16.xpose.msra.mxu0 0
        %809 = vmatprep.subr.bf16.mxu0 0
        %810 = vmatpush2.bf16.xpose.msra.mxu0 0
        %811 = vmatprep.subr.bf16.mxu0 0
        %812 = vmatpush2.bf16.xpose.msra.mxu0 0
        %813 = vmatprep.subr.bf16.mxu0 0
        %814 = vmatpush2.bf16.xpose.msra.mxu0 0
        %815 = vmatprep.mubr.bf16.mxu0 0
        %816 = vmatmul.mubr.bf16.gmra.mxu0 %v778
        %v817 = vpop.f32.mrf.mxu0
        %v818 = vadd.f32 %v772, %v817
        %v819 = vpop.f32.mrf.mxu0
        %v820 = vpop.f32.mrf.mxu0
        %v821 = vpop.f32.mrf.mxu0
        %822 = vdwg.mxu0
        %vm823 = vcmask 64512
        %v824 = vsel %vm823, %v818, -inf
        %825 = vmax.xlane.f32.xlu0 %v824
        %v826 = vpop.xlane.xlu0 %825
        %v827 = vsub.f32 %v818, %v826
        %v828 = vmul.f32 %v827, 1.442695
        %v829 = vpow.pop %v828
        %v830 = vsel %vm823, %v829, 0.0
        %831 = vadd.xlane.f32.xlu0 %v830
        %v832 = vpop.xlane.xlu0 %831
        %v833 = vpack.c.bf16 %v829, %v829
        %834 = vrot.lane.b32.xlu0 %v766, 64
        %v835 = vpop.permute.xlu0 %834
        %v837 = vsel %vm823, %v833, 0
        %vm839 = vcmask 1043456
        %v841 = vsel %vm839, %v835, 0
        %843 = vmatprep.subr.bf16.mxu0 0
        %844 = vmatpush1.bf16.msra.mxu0 0
        %845 = vmatprep.subr.bf16.mxu0 0
        %846 = vmatpush1.bf16.msra.mxu0 0
        %847 = vmatprep.subr.bf16.mxu0 0
        %848 = vmatpush1.bf16.msra.mxu0 0
        %849 = vmatprep.subr.bf16.mxu0 0
        %850 = vmatpush1.bf16.msra.mxu0 0
        %851 = vmatprep.subr.bf16.mxu0 0
        %852 = vmatpush1.bf16.msra.mxu0 0
        %853 = vmatprep.subr.bf16.mxu0 0
        %854 = vmatpush1.bf16.msra.mxu0 0
        %855 = vmatprep.subr.bf16.mxu0 0
        %856 = vmatpush1.bf16.msra.mxu0 0
        %857 = vmatprep.subr.bf16.mxu0 0
        %858 = vmatpush1.bf16.msra.mxu0 %v841
        %859 = vmatprep.subr.bf16.mxu0 0
        %860 = vmatpush2.bf16.msra.mxu0 0
        %861 = vmatprep.subr.bf16.mxu0 0
        %862 = vmatpush2.bf16.msra.mxu0 0
        %863 = vmatprep.subr.bf16.mxu0 0
        %864 = vmatpush2.bf16.msra.mxu0 0
        %865 = vmatprep.subr.bf16.mxu0 0
        %866 = vmatpush2.bf16.msra.mxu0 0
        %867 = vmatprep.subr.bf16.mxu0 0
        %868 = vmatpush2.bf16.msra.mxu0 0
        %869 = vmatprep.subr.bf16.mxu0 0
        %870 = vmatpush2.bf16.msra.mxu0 0
        %871 = vmatprep.subr.bf16.mxu0 0
        %872 = vmatpush2.bf16.msra.mxu0 0
        %873 = vmatprep.subr.bf16.mxu0 0
        %874 = vmatpush2.bf16.msra.mxu0 0
        %875 = vmatprep.mubr.bf16.mxu0 0
        %876 = vmatmul.mubr.bf16.gmra.mxu0 %v837
        %v877 = vpop.f32.mrf.mxu0
        %v878 = vadd.f32 0.0, %v877
        %v879 = vpop.f32.mrf.mxu0
        %v880 = vpop.f32.mrf.mxu0
        %v881 = vpop.f32.mrf.mxu0
        %882 = vdwg.mxu0
        %v883 = vrcp.pop %v832
        %v884 = vmul.f32 %v878, %v883
        %v885 = vpack.c.bf16 %v884, %v884
        %v886 = vld [vmem:[%s5] sm:$0xf]
        %v887 = vld [vmem:[%s5 + $0x4] sm:$0xf]
        %v888 = vld [vmem:[%s5 + $0x8] sm:$0xf]
        %v889 = vld [vmem:[%s5 + $0xc] sm:$0xf]
        %v890 = vld [vmem:[#allocation10] sm:$0x1]
        %v892 = vlaneseq
        %v893 = vshrl.u32 %v892, 7
        %v894 = vsub.s32 0, %v893
        %v895 = vrot.slane %v890, %v894
        %v901 = vunpack.c.l.b16 %v886
        %v902 = vunpack.c.l.b16 %v887
        %v903 = vunpack.c.l.b16 %v888
        %v904 = vunpack.c.l.b16 %v889
        %v905 = vpack.c.b16 %v902, %v901
        %v906 = vpack.c.b16 %v904, %v903
        %v910 = vsel %vm722, %v885, 0
        %912 = vmatprep.subr.bf16.mxu0 0
        %913 = vmatpush1.bf16.msra.mxu0 0
        %914 = vmatprep.subr.bf16.mxu0 0
        %915 = vmatpush1.bf16.msra.mxu0 0
        %916 = vmatprep.subr.bf16.mxu0 0
        %917 = vmatpush1.bf16.msra.mxu0 0
        %918 = vmatprep.subr.bf16.mxu0 0
        %919 = vmatpush1.bf16.msra.mxu0 0
        %920 = vmatprep.subr.bf16.mxu0 0
        %921 = vmatpush1.bf16.msra.mxu0 0
        %922 = vmatprep.subr.bf16.mxu0 0
        %923 = vmatpush1.bf16.msra.mxu0 0
        %924 = vmatprep.subr.bf16.mxu0 0
        %925 = vmatpush1.bf16.msra.mxu0 %v906
        %926 = vmatprep.subr.bf16.mxu0 0
        %927 = vmatpush1.bf16.msra.mxu0 %v905
        %928 = vmatprep.subr.bf16.mxu0 0
        %929 = vmatpush2.bf16.msra.mxu0 0
        %930 = vmatprep.subr.bf16.mxu0 0
        %931 = vmatpush2.bf16.msra.mxu0 0
        %932 = vmatprep.subr.bf16.mxu0 0
        %933 = vmatpush2.bf16.msra.mxu0 0
        %934 = vmatprep.subr.bf16.mxu0 0
        %935 = vmatpush2.bf16.msra.mxu0 0
        %936 = vmatprep.subr.bf16.mxu0 0
        %937 = vmatpush2.bf16.msra.mxu0 0
        %938 = vmatprep.subr.bf16.mxu0 0
        %939 = vmatpush2.bf16.msra.mxu0 0
        %940 = vmatprep.subr.bf16.mxu0 0
        %941 = vmatpush2.bf16.msra.mxu0 0
        %942 = vmatprep.subr.bf16.mxu0 0
        %943 = vmatpush2.bf16.msra.mxu0 0
        %944 = vmatprep.mubr.bf16.mxu0 0
        %945 = vmatmul.mubr.bf16.gmra.mxu0 %v910
        %v946 = vpop.f32.mrf.mxu0
        %v947 = vadd.f32 %v895, %v946
        %v948 = vpop.f32.mrf.mxu0
        %v949 = vpop.f32.mrf.mxu0
        %v950 = vpop.f32.mrf.mxu0
        %951 = vdwg.mxu0
        %v952 = vadd.f32 %v698, %v947
        %v953 = vsel %vm722, %v952, 0.0
        %954 = vadd.xlane.f32.xlu0 %v953
        %v955 = vpop.xlane.xlu0 %954
        %v956 = vrcp.pop 32.0
        %v957 = vmul.f32 %v955, %v956
        %v958 = vsub.f32 %v952, %v957
        %v959 = vmul.f32 %v958, %v958
        %v960 = vsel %vm722, %v959, 0.0
        %961 = vadd.xlane.f32.xlu0 %v960
        %v962 = vpop.xlane.xlu0 %961
        %v963 = vmul.f32 %v962, %v956
        %v964 = vadd.f32 %v963, 1e-05
        %v965 = vrsqrt.pop %v964
        %v966 = vmul.f32 %v958, %v965
        %v967 = vld [vmem:[#allocation12] sm:$0x1]
        %v969 = vlaneseq
        %v970 = vshrl.u32 %v969, 7
        %v971 = vsub.s32 0, %v970
        %v972 = vrot.slane %v967, %v971
        %v974 = vmul.f32 %v966, %v972
        %v975 = vld [vmem:[#allocation13] sm:$0x1]
        %v977 = vlaneseq
        %v978 = vshrl.u32 %v977, 7
        %v979 = vsub.s32 0, %v978
        %v980 = vrot.slane %v975, %v979
        %v982 = vadd.f32 %v974, %v980
        %v983 = vpack.c.bf16 %v982, %v982
        %v984 = vld [vmem:[%s9] sm:$0xf]
        %v985 = vld [vmem:[%s9 + $0x4] sm:$0xf]
        %v986 = vld [vmem:[%s9 + $0x8] sm:$0xf]
        %v987 = vld [vmem:[%s9 + $0xc] sm:$0xf]
        %v988 = vld [vmem:[%s10] sm:$0x1]
        %v990 = vlaneseq
        %v991 = vshrl.u32 %v990, 7
        %v992 = vsub.s32 0, %v991
        %v993 = vrot.slane %v988, %v992
        %v999 = vunpack.c.l.b16 %v984
        %v1000 = vunpack.c.l.b16 %v985
        %v1001 = vunpack.c.l.b16 %v986
        %v1002 = vunpack.c.l.b16 %v987
        %v1003 = vpack.c.b16 %v1000, %v999
        %v1004 = vpack.c.b16 %v1002, %v1001
        %v1008 = vsel %vm722, %v983, 0
        %1010 = vmatprep.subr.bf16.mxu0 0
        %1011 = vmatpush1.bf16.msra.mxu0 0
        %1012 = vmatprep.subr.bf16.mxu0 0
        %1013 = vmatpush1.bf16.msra.mxu0 0
        %1014 = vmatprep.subr.bf16.mxu0 0
        %1015 = vmatpush1.bf16.msra.mxu0 0
        %1016 = vmatprep.subr.bf16.mxu0 0
        %1017 = vmatpush1.bf16.msra.mxu0 0
        %1018 = vmatprep.subr.bf16.mxu0 0
        %1019 = vmatpush1.bf16.msra.mxu0 0
        %1020 = vmatprep.subr.bf16.mxu0 0
        %1021 = vmatpush1.bf16.msra.mxu0 0
        %1022 = vmatprep.subr.bf16.mxu0 0
        %1023 = vmatpush1.bf16.msra.mxu0 %v1004
        %1024 = vmatprep.subr.bf16.mxu0 0
        %1025 = vmatpush1.bf16.msra.mxu0 %v1003
        %1026 = vmatprep.subr.bf16.mxu0 0
        %1027 = vmatpush2.bf16.msra.mxu0 0
        %1028 = vmatprep.subr.bf16.mxu0 0
        %1029 = vmatpush2.bf16.msra.mxu0 0
        %1030 = vmatprep.subr.bf16.mxu0 0
        %1031 = vmatpush2.bf16.msra.mxu0 0
        %1032 = vmatprep.subr.bf16.mxu0 0
        %1033 = vmatpush2.bf16.msra.mxu0 0
        %1034 = vmatprep.subr.bf16.mxu0 0
        %1035 = vmatpush2.bf16.msra.mxu0 0
        %1036 = vmatprep.subr.bf16.mxu0 0
        %1037 = vmatpush2.bf16.msra.mxu0 0
        %1038 = vmatprep.subr.bf16.mxu0 0
        %1039 = vmatpush2.bf16.msra.mxu0 0
        %1040 = vmatprep.subr.bf16.mxu0 0
        %1041 = vmatpush2.bf16.msra.mxu0 0
        %1042 = vmatprep.mubr.bf16.mxu0 0
        %1043 = vmatmul.mubr.bf16.gmra.mxu0 %v1008
        %v1044 = vpop.f32.mrf.mxu0
        %v1045 = vadd.f32 %v993, %v1044
        %v1046 = vpop.f32.mrf.mxu0
        %v1047 = vpop.f32.mrf.mxu0
        %v1048 = vpop.f32.mrf.mxu0
        %1049 = vdwg.mxu0
        %v1050 = vmul.f32 %v1045, %v1045
        %v1051 = vmul.f32 %v1045, %v1050
        %v1052 = vmul.f32 %v1051, 0.044715
        %v1053 = vadd.f32 %v1045, %v1052
        %v1054 = vmul.f32 %v1053, 0.7978846
        %v1055 = vtanh.pop %v1054
        %v1056 = vadd.f32 %v1055, 1.0
        %v1057 = vmul.f32 %v1056, 0.5
        %v1058 = vmul.f32 %v1045, %v1057
        %v1059 = vpack.c.bf16 %v1058, %v1058
        %v1060 = vld [vmem:[%s11] sm:$0xf]
        %v1061 = vld [vmem:[%s11 + $0x4] sm:$0xf]
        %v1062 = vld [vmem:[%s11 + $0x8] sm:$0xf]
        %v1063 = vld [vmem:[%s11 + $0xc] sm:$0xf]
        %v1064 = vld [vmem:[%s11 + $0x10] sm:$0xf]
        %v1065 = vld [vmem:[%s11 + $0x14] sm:$0xf]
        %v1066 = vld [vmem:[%s11 + $0x18] sm:$0xf]
        %v1067 = vld [vmem:[%s11 + $0x1c] sm:$0xf]
        %v1068 = vld [vmem:[%s12] sm:$0x1]
        %v1070 = vlaneseq
        %v1071 = vshrl.u32 %v1070, 7
        %v1072 = vsub.s32 0, %v1071
        %v1073 = vrot.slane %v1068, %v1072
        %v1083 = vunpack.c.l.b16 %v1060
        %v1084 = vunpack.c.l.b16 %v1061
        %v1085 = vunpack.c.l.b16 %v1062
        %v1086 = vunpack.c.l.b16 %v1063
        %v1087 = vunpack.c.l.b16 %v1064
        %v1088 = vunpack.c.l.b16 %v1065
        %v1089 = vunpack.c.l.b16 %v1066
        %v1090 = vunpack.c.l.b16 %v1067
        %v1091 = vpack.c.b16 %v1084, %v1083
        %v1092 = vpack.c.b16 %v1086, %v1085
        %v1093 = vpack.c.b16 %v1088, %v1087
        %v1094 = vpack.c.b16 %v1090, %v1089
        %vm1099 = vcmask 523264
        %v1101 = vsel %vm1099, %v1059, 0
        %1103 = vmatprep.subr.bf16.mxu0 0
        %1104 = vmatpush1.bf16.msra.mxu0 0
        %1105 = vmatprep.subr.bf16.mxu0 0
        %1106 = vmatpush1.bf16.msra.mxu0 0
        %1107 = vmatprep.subr.bf16.mxu0 0
        %1108 = vmatpush1.bf16.msra.mxu0 0
        %1109 = vmatprep.subr.bf16.mxu0 0
        %1110 = vmatpush1.bf16.msra.mxu0 0
        %1111 = vmatprep.subr.bf16.mxu0 0
        %1112 = vmatpush1.bf16.msra.mxu0 %v1094
        %1113 = vmatprep.subr.bf16.mxu0 0
        %1114 = vmatpush1.bf16.msra.mxu0 %v1093
        %1115 = vmatprep.subr.bf16.mxu0 0
        %1116 = vmatpush1.bf16.msra.mxu0 %v1092
        %1117 = vmatprep.subr.bf16.mxu0 0
        %1118 = vmatpush1.bf16.msra.mxu0 %v1091
        %1119 = vmatprep.subr.bf16.mxu0 0
        %1120 = vmatpush2.bf16.msra.mxu0 0
        %1121 = vmatprep.subr.bf16.mxu0 0
        %1122 = vmatpush2.bf16.msra.mxu0 0
        %1123 = vmatprep.subr.bf16.mxu0 0
        %1124 = vmatpush2.bf16.msra.mxu0 0
        %1125 = vmatprep.subr.bf16.mxu0 0
        %1126 = vmatpush2.bf16.msra.mxu0 0
        %1127 = vmatprep.subr.bf16.mxu0 0
        %1128 = vmatpush2.bf16.msra.mxu0 0
        %1129 = vmatprep.subr.bf16.mxu0 0
        %1130 = vmatpush2.bf16.msra.mxu0 0
        %1131 = vmatprep.subr.bf16.mxu0 0
        %1132 = vmatpush2.bf16.msra.mxu0 0
        %1133 = vmatprep.subr.bf16.mxu0 0
        %1134 = vmatpush2.bf16.msra.mxu0 0
        %1135 = vmatprep.mubr.bf16.mxu0 0
        %1136 = vmatmul.mubr.bf16.gmra.mxu0 %v1101
        %v1137 = vpop.f32.mrf.mxu0
        %v1138 = vadd.f32 %v1073, %v1137
        %v1139 = vpop.f32.mrf.mxu0
        %v1140 = vpop.f32.mrf.mxu0
        %v1141 = vpop.f32.mrf.mxu0
        %1142 = vdwg.mxu0
        %v1143 = vadd.f32 %v982, %v1138
        %v1144 = vsel %vm722, %v1143, 0.0
        %1145 = vadd.xlane.f32.xlu0 %v1144
        %v1146 = vpop.xlane.xlu0 %1145
        %v1147 = vmul.f32 %v1146, %v956
        %v1148 = vsub.f32 %v1143, %v1147
        %v1149 = vmul.f32 %v1148, %v1148
        %v1150 = vsel %vm722, %v1149, 0.0
        %1151 = vadd.xlane.f32.xlu0 %v1150
        %v1152 = vpop.xlane.xlu0 %1151
        %v1153 = vmul.f32 %v1152, %v956
        %v1154 = vadd.f32 %v1153, 1e-05
        %v1155 = vrsqrt.pop %v1154
        %v1156 = vmul.f32 %v1148, %v1155
        %v1157 = vld [vmem:[%s13] sm:$0x1]
        %v1159 = vlaneseq
        %v1160 = vshrl.u32 %v1159, 7
        %v1161 = vsub.s32 0, %v1160
        %v1162 = vrot.slane %v1157, %v1161
        %v1164 = vmul.f32 %v1156, %v1162
        %v1165 = vld [vmem:[%s14] sm:$0x1]
        %v1167 = vlaneseq
        %v1168 = vshrl.u32 %v1167, 7
        %v1169 = vsub.s32 0, %v1168
        %v1170 = vrot.slane %v1165, %v1169
        %v1172 = vadd.f32 %v1164, %v1170
        %v1173 = vpack.c.bf16 %v1172, %v1172
        %v1174 = vld [vmem:[%s15] sm:$0xf]
        %v1175 = vld [vmem:[%s15 + $0x4] sm:$0xf]
        %v1176 = vld [vmem:[%s15 + $0x8] sm:$0xf]
        %v1177 = vld [vmem:[%s15 + $0xc] sm:$0xf]
        %v1178 = vld [vmem:[%s16] sm:$0x1]
        %v1183 = vunpack.c.l.b16 %v1174
        %v1184 = vunpack.c.l.b16 %v1175
        %v1185 = vunpack.c.l.b16 %v1176
        %v1186 = vunpack.c.l.b16 %v1177
        %v1187 = vpack.c.b16 %v1184, %v1183
        %v1188 = vpack.c.b16 %v1186, %v1185
        %v1192 = vsel %vm722, %v1173, 0
        %1194 = vmatprep.subr.bf16.mxu0 0
        %1195 = vmatpush1.bf16.msra.mxu0 0
        %1196 = vmatprep.subr.bf16.mxu0 0
        %1197 = vmatpush1.bf16.msra.mxu0 0
        %1198 = vmatprep.subr.bf16.mxu0 0
        %1199 = vmatpush1.bf16.msra.mxu0 0
        %1200 = vmatprep.subr.bf16.mxu0 0
        %1201 = vmatpush1.bf16.msra.mxu0 0
        %1202 = vmatprep.subr.bf16.mxu0 0
        %1203 = vmatpush1.bf16.msra.mxu0 0
        %1204 = vmatprep.subr.bf16.mxu0 0
        %1205 = vmatpush1.bf16.msra.mxu0 0
        %1206 = vmatprep.subr.bf16.mxu0 0
        %1207 = vmatpush1.bf16.msra.mxu0 %v1188
        %1208 = vmatprep.subr.bf16.mxu0 0
        %1209 = vmatpush1.bf16.msra.mxu0 %v1187
        %1210 = vmatprep.subr.bf16.mxu0 0
        %1211 = vmatpush2.bf16.msra.mxu0 0
        %1212 = vmatprep.subr.bf16.mxu0 0
        %1213 = vmatpush2.bf16.msra.mxu0 0
        %1214 = vmatprep.subr.bf16.mxu0 0
        %1215 = vmatpush2.bf16.msra.mxu0 0
        %1216 = vmatprep.subr.bf16.mxu0 0
        %1217 = vmatpush2.bf16.msra.mxu0 0
        %1218 = vmatprep.subr.bf16.mxu0 0
        %1219 = vmatpush2.bf16.msra.mxu0 0
        %1220 = vmatprep.subr.bf16.mxu0 0
        %1221 = vmatpush2.bf16.msra.mxu0 0
        %1222 = vmatprep.subr.bf16.mxu0 0
        %1223 = vmatpush2.bf16.msra.mxu0 0
        %1224 = vmatprep.subr.bf16.mxu0 0
        %1225 = vmatpush2.bf16.msra.mxu0 0
        %1226 = vmatprep.mubr.bf16.mxu0 0
        %1227 = vmatmul.mubr.bf16.gmra.mxu0 %v1192
        %v1228 = vpop.f32.mrf.mxu0
        %v1229 = vadd.f32 %v1178, %v1228
        %v1230 = vpop.f32.mrf.mxu0
        %v1231 = vpop.f32.mrf.mxu0
        %v1232 = vpop.f32.mrf.mxu0
        %1233 = vdwg.mxu0
        %v1234 = vxor.u32 %v1229, 2147483648
        %v1235 = vmul.f32 %v1234, 1.442695
        %v1236 = vpow.pop %v1235
        %v1237 = vadd.f32 %v1236, 1.0
        %v1238 = vrcp.pop %v1237
        %v1239 = vmul.f32 1.0, %v1238
        %1240 = vst [vmem:[%s689] sm:$0x1] %v1239
        %s1241 = sld [smem:[#allocation8 + %s45]]
        %v1242 = vmin.f32 %v1229, 0.0
        %v1243 = vand.u32 2147483647, %v1229
        %v1244 = vsub.f32 0.0, %v1243
        %v1245 = vmul.f32 %v1244, 1.442695
        %v1246 = vpow.pop %v1245
        %v1247 = vadd.f32 %v1246, 1.0
        %v1248 = vlog2.pop %v1247
        %v1249 = vmul.f32 %v1248, 0.6931472
        %v1250 = vsub.f32 %v1242, %v1249
        %v1251 = vsub.f32 0.0, %v1229
        %v1252 = vmin.f32 %v1251, 0.0
        %v1253 = vsub.f32 %v1252, %v1249
        %v1254 = vmax.f32 %v1250, -23.02585
        %v1255 = vmax.f32 %v1253, -23.02585
        %v1256 = vmul.f32 %v1254, 1.5
        %v1257 = vstv %s1241
        %v1258 = vmul.f32 %v1256, %v1257
        %s1259 = ssub.f32 1.0, %s1241
        %v1260 = vstv %s1259
        %v1261 = vmul.f32 %v1255, %v1260
        %v1262 = vadd.f32 %v1258, %v1261
        %1264 = vset.pattern.permute.xlu0 0
        %1265 = vperm.xlu0 %1264, %v1262
        %v1266 = vpop.permute.xlu0 %1265
        %1268 = vst [vmem:[%s695] sm:$0x1] %v1266
        %s1269 = sand.u32 %s420, 1
        %s1270 = scalar_lea.sflag [#allocation4], %s1269
        %s1271 = sand.u32 %s420, 1
        %s1272 = scalar_lea.vmem [#allocation15], %s1271
        %s1273 = sand.u32 %s446, 1
        %s1274 = scalar_lea.sflag [#allocation17], %s1273
        %s1275 = sand.u32 %s446, 1
        %s1276 = scalar_lea.vmem [#allocation16], %s1275
        // Predicated region
        $region117: #{tpu_custom_call.1} parent=87 // pred_check
          %p1277 = pneg %p430
        $region118: #{tpu_custom_call.1} parent=87 // pred_check_branch
          %1279 = sbr.rel (%p1277) target = $region120
        $region119: #{tpu_custom_call.1} parent=87 // pred_region
          %s1281 = ssub.s32 16, 16
          %1282 = vsyncadd %s1270, %s1281
          %s1283 = smul.addr %s45, 16
          %s1284 = scalar_lea.hbm %s17, %s1283
          %s1286 = sshll.u32 %s1272, 4
          %s1287 = int_to_ptr.vmem [resolvable:$true] %s1286
          %1289 = dma.vmem_to_hbm [thread:$0]  %s1287, 16, %s1284, %s1270
        $region120: #{tpu_custom_call.1} parent=87 // pred_fallthru
          _
        // Predicated region
        $region121: #{tpu_custom_call.1} parent=87 // pred_check
          %p1290 = pneg %p456
        $region122: #{tpu_custom_call.1} parent=87 // pred_check_branch
          %1292 = sbr.rel (%p1290) target = $region124
        $region123: #{tpu_custom_call.1} parent=87 // pred_region
          %s1294 = ssub.s32 16, 16
          %1295 = vsyncadd %s1274, %s1294
          %s1296 = smul.addr %s45, 16
          %s1297 = scalar_lea.hbm %s18, %s1296
          %s1299 = sshll.u32 %s1276, 4
          %s1300 = int_to_ptr.vmem [resolvable:$true] %s1299
          %1302 = dma.vmem_to_hbm [thread:$0]  %s1300, 16, %s1297, %s1274
        $region124: #{tpu_custom_call.1} parent=87 // pred_fallthru
          _
      $region88: #{tpu_custom_call.1} parent=5 // pred_fallthru
        _
      %p1303 = scmp.le.s32.totalorder 2, %s40
      // Predicated region
      $region125: #{tpu_custom_call.1} parent=5 // pred_check
        %p1304 = pneg %p1303
      $region126: #{tpu_custom_call.1} parent=5 // pred_check_branch
        %1306 = sbr.rel (%p1304) target = $region128
      $region127: #{tpu_custom_call.1} parent=5 // pred_region
        %s1307 = ssub.s32 %s40, 2
        // Predicated region
        $region129: #{tpu_custom_call.1} parent=127 // pred_check
          %p1308 = pneg %p436
        $region130: #{tpu_custom_call.1} parent=127 // pred_check_branch
          %1310 = sbr.rel (%p1308) target = $region132
        $region131: #{tpu_custom_call.1} parent=127 // pred_region
          %s1311 = sand.u32 %s421, 1
          %s1312 = scalar_lea.sflag [#allocation4], %s1311
          %s1313 = sand.u32 %s421, 1
          %s1314 = scalar_lea.vmem [#allocation15], %s1313
          %1315 = dma.done %s1312, 16
        $region132: #{tpu_custom_call.1} parent=127 // pred_fallthru
          _
        // Predicated region
        $region133: #{tpu_custom_call.1} parent=127 // pred_check
          %p1316 = pneg %p462
        $region134: #{tpu_custom_call.1} parent=127 // pred_check_branch
          %1318 = sbr.rel (%p1316) target = $region136
        $region135: #{tpu_custom_call.1} parent=127 // pred_region
          %s1319 = sand.u32 %s447, 1
          %s1320 = scalar_lea.sflag [#allocation17], %s1319
          %s1321 = sand.u32 %s447, 1
          %s1322 = scalar_lea.vmem [#allocation16], %s1321
          %1323 = dma.done %s1320, 16
        $region136: #{tpu_custom_call.1} parent=127 // pred_fallthru
          _
      $region128: #{tpu_custom_call.1} parent=5 // pred_fallthru
        _
    $region6: #{tpu_custom_call.1} parent=1 // loop_footer
      %s44 = sadd.s32 1, %s40
    $region7: #{tpu_custom_call.1} parent=1 // loop_footer_branch
      %39 = sbr.rel target = $region3
    $region8: #{tpu_custom_call.1} parent=1 // loop_exit
      _
    %1324 = vsyncpa [#allocation3], 1
    %s1325 = scalar_lea.sflag [#allocation3], 1
    %1326 = vsyncpa %s1325, 1
    %1327 = vsyncpa [#allocation7], 1
    %s1328 = scalar_lea.sflag [#allocation7], 1
    %1329 = vsyncpa %s1328, 1
    %1330 = vsyncpa [#allocation11], 1
    %1331 = vsyncpa [#allocation14], 1
    %1332 = vsyncpa [#allocation4], 1
    %s1333 = scalar_lea.sflag [#allocation4], 1
    %1334 = vsyncpa %s1333, 1
    %1335 = vsyncpa [#allocation17], 1
    %s1336 = scalar_lea.sflag [#allocation17], 1
    %1337 = vsyncpa %s1336, 1
    %1338 = vsyncpa [#allocation5], 1
    %s1339 = scalar_lea.sflag [#allocation5], 1
    %1340 = vsyncpa %s1339, 1

</llo_original>
